<compile_context>
chip_gen: v7x
topology: tpu7x:2x2x1
jax: 0.10.0
libtpu: 0.0.40
codegen_flags: <defaults>
</compile_context>

<pallas_src>
import numpy as np
import jax
import jax.numpy as jnp
from jax.experimental import pallas as pl
from jax.experimental.pallas import tpu as pltpu

# -----------------------------------------------------------------------------
# Weight construction helpers (exact ports of the nn.Linear builders).
# A "layer" is a tuple (W, b) with W: (out, in), b: (out,);  'relu' marks a ReLU.
# -----------------------------------------------------------------------------
def lin(W, b=None):
    W = np.asarray(W, dtype=np.float32)
    if b is None:
        b = np.zeros(W.shape[0], dtype=np.float32)
    return (W, np.asarray(b, dtype=np.float32))


def identity_relu(dim):
    I = np.eye(dim, dtype=np.float32)
    return [lin(np.vstack([I, -I])), "relu", lin(np.hstack([I, -I]))]


def identity(dim):
    return lin(np.eye(dim, dtype=np.float32))


def broadcast(dim, k):
    I = np.eye(dim, dtype=np.float32)
    return lin(np.vstack([I] * k))


def add(dim):
    I = np.eye(dim, dtype=np.float32)
    return lin(np.hstack([I, I]))


def sub(dim):
    I = np.eye(dim, dtype=np.float32)
    return lin(np.hstack([I, -I]))


def l1norm(dim):
    I = np.eye(dim, dtype=np.float32)
    return [lin(np.vstack([I, -I])), "relu",
            lin(np.ones((1, 2 * dim), dtype=np.float32)), "relu"]


def vstack_layers(layers):
    """Block-diagonal stacking of Linear layers (torch APVComposite.vstack)."""
    ins = [W.shape[1] for W, _ in layers]
    outs = [W.shape[0] for W, _ in layers]
    Wres = np.zeros((sum(outs), sum(ins)), dtype=np.float32)
    bres = np.concatenate([b for _, b in layers]).astype(np.float32)
    ro = co = 0
    for W, _ in layers:
        o, i = W.shape
        Wres[ro:ro + o, co:co + i] = W
        ro += o
        co += i
    return (Wres, bres)


def hstack_layers(layers):
    """Functional composition of consecutive Linear layers (torch .hstack)."""
    Wres, bres = layers[0]
    for W, b in layers[1:]:
        bres = b + W @ bres
        Wres = W @ Wres
    return (Wres.astype(np.float32), bres.astype(np.float32))


def contract(layers):
    """Collapse consecutive Linear layers -> (Linear ReLU)* Linear."""
    result, group = [], []
    for layer in layers:
        if isinstance(layer, str):
            result.append(hstack_layers(group))
            result.append("relu")
            group = []
        else:
            group.append(layer)
    if group:
        result.append(hstack_layers(group))
    return result


def build_composite(A, P, V, dim):
    """Exact port of APVComposite.build."""
    layers = []
    layers.append(vstack_layers([broadcast(dim, 3), broadcast(dim, 2)]))
    IR = identity_relu(dim)
    layers.append(vstack_layers([IR[0], IR[0], P[0], IR[0], IR[0]]))
    layers.append("relu")
    layers.append(vstack_layers([IR[2], IR[2], P[2], IR[2], IR[2]]))
    IR = identity_relu(dim)
    layers.append(vstack_layers([IR[0], A[0], IR[0], IR[0]]))
    layers.append("relu")
    layers.append(vstack_layers([IR[2], A[2], IR[2], IR[2]]))
    layers.append(vstack_layers([identity(dim), add(dim), identity(dim)]))
    IR5 = contract(IR + IR)  # [L, relu, L, relu, L]
    layers.append(vstack_layers([V[0], V[0], IR5[0]]))
    layers.append("relu")
    layers.append(vstack_layers([V[2], V[2], IR5[2]]))
    layers.append("relu")
    layers.append(vstack_layers([identity(1), identity(1), IR5[4]]))
    IR1 = identity_relu(1)
    L1N = l1norm(dim)
    layers.append(vstack_layers([IR1[0], IR1[0], L1N[0]]))
    layers.append("relu")
    layers.append(vstack_layers([IR1[2], IR1[2], L1N[2]]))
    layers.append(vstack_layers([sub(1), identity(1)]))
    return contract(layers)


def mlp_ref(layers, x):
    """Plain numpy reference for a (W,b)/'relu' layer list."""
    h = x
    for layer in layers:
        if isinstance(layer, str):
            h = np.maximum(h, 0.0)
        else:
            W, b = layer
            h = h @ W.T + b
    return h


# -----------------------------------------------------------------------------
# Pallas kernel: full contracted affine+ReLU chain on one tile of rows.
#   x_ref : (ROW_TILE, F_PAD)   rows of [x|y], natural feature width (<=128)
#   w0_ref: (F_PAD, 128)        first weight, stored (in, out) so we do x @ W0
#   w_ref : (5, 128, 128)       remaining packed weights, (in, out) layout
#   b_ref : (8, 128)            packed biases (rows 0..5 used)
#   o_ref : (ROW_TILE, 128)     output (columns 0..1 are the real outputs)
# -----------------------------------------------------------------------------
def composite_kernel(x_ref, w0_ref, w_ref, b_ref, o_ref):
    n_rest = w_ref.shape[0]
    # layer 0: narrow-contraction matmul (only the real input lanes are read)
    h = jnp.dot(x_ref[...], w0_ref[...], preferred_element_type=jnp.float32)
    h = h + b_ref[0:1, :]
    for i in range(n_rest):                  # static unrolled layer loop
        h = jnp.maximum(h, 0.0)              # ReLU between consecutive layers
        h = jnp.dot(h, w_ref[i], preferred_element_type=jnp.float32)
        h = h + b_ref[i + 1:i + 2, :]
    o_ref[...] = h                           # no ReLU after the last Linear


def run_composite_pallas(linears, xy, row_tile=256):
    """linears: list of 6 (W,b) contracted affine layers; xy: (B, 2*dim) f32."""
    D_PAD = 128
    n = len(linears)
    B, F = xy.shape
    F_pad = ((F + 7) // 8) * 8               # sublane-align the input width
    assert F_pad <= D_PAD
    # all hidden widths of the contracted chain must fit in the 128-lane pad
    assert all(max(W.shape) <= D_PAD for W, _ in linears)

    num_tiles = int(pl.cdiv(B, row_tile))
    B_pad = num_tiles * row_tile

    # Rows padded to the row tile; features kept at their natural (8-aligned) width.
    x_pad = np.zeros((B_pad, F_pad), dtype=np.float32)
    x_pad[:B, :F] = xy

    # First weight separately (narrow contraction), the rest packed together.
    W0, b0 = linears[0]
    w0_pack = np.zeros((F_pad, D_PAD), dtype=np.float32)
    w0_pack[:W0.shape[1], :W0.shape[0]] = W0.T          # (in, out) layout

    w_pack = np.zeros((n - 1, D_PAD, D_PAD), dtype=np.float32)
    b_pack = np.zeros((8, D_PAD), dtype=np.float32)
    b_pack[0, :b0.shape[0]] = b0
    for i, (W, b) in enumerate(linears[1:], start=1):
        out_f, in_f = W.shape
        w_pack[i - 1, :in_f, :out_f] = W.T              # (in, out) layout for h @ W
        b_pack[i, :out_f] = b

    f = pl.pallas_call(
        composite_kernel,
        out_shape=jax.ShapeDtypeStruct((B_pad, D_PAD), jnp.float32),
        grid=(num_tiles,),
        in_specs=[
            pl.BlockSpec((row_tile, F_pad), lambda r: (r, 0)),        # row tiles
            pl.BlockSpec((F_pad, D_PAD), lambda r: (0, 0)),           # resident W0
            pl.BlockSpec((n - 1, D_PAD, D_PAD), lambda r: (0, 0, 0)),  # resident W1..5
            pl.BlockSpec((8, D_PAD), lambda r: (0, 0)),               # resident biases
        ],
        out_specs=pl.BlockSpec((row_tile, D_PAD), lambda r: (r, 0)),  # lane-dense out
        compiler_params=pltpu.CompilerParams(
            dimension_semantics=("parallel",)),   # v7x: both TCs split the rows
    )
    out_pad = f(jnp.asarray(x_pad), jnp.asarray(w0_pack),
                jnp.asarray(w_pack), jnp.asarray(b_pack))
    return out_pad[:B, :2]                        # composite output is 2-wide


# -----------------------------------------------------------------------------
# Deterministic parameter / input setup and test.
# -----------------------------------------------------------------------------
def rand_linear(key, out_f, in_f, scale=0.3):
    kw, kb = jax.random.split(key)
    W = np.asarray(jax.random.normal(kw, (out_f, in_f)) * scale, dtype=np.float32)
    b = np.asarray(jax.random.normal(kb, (out_f,)) * scale, dtype=np.float32)
    return (W, b)


if __name__ == "__main__":
    DIM = 8         # state dimensionality
    HP, PD = 16, 4  # P hidden / output dims
    HA = 16         # A hidden dim
    HV = 16         # V hidden dim

    key = jax.random.PRNGKey(0)
    k = jax.random.split(key, 8)

    # A, P, V as (Linear, ReLU, Linear) stacks -- deterministic synthetic weights.
    P = [rand_linear(k[0], HP, DIM), "relu", rand_linear(k[1], PD, HP)]
    A = [rand_linear(k[2], HA, DIM + PD), "relu", rand_linear(k[3], DIM, HA)]
    V = [rand_linear(k[4], HV, DIM), "relu", rand_linear(k[5], 1, HV)]

    composite = build_composite(A, P, V, DIM)          # (L relu)*5 L -> 6 linears
    linears = [l for l in composite if not isinstance(l, str)]
    assert len(linears) == 6

    # Batched rows of [x | y]; B is deliberately not a multiple of the row tile
    # to exercise the padding path (grid of 2 steps at row_tile=256).
    B = 500
    xy = np.asarray(jax.random.normal(k[6], (B, 2 * DIM)) * 0.5, dtype=np.float32)

    # Pallas kernel result.
    out = run_composite_pallas(linears, xy, row_tile=256)
    out = jax.block_until_ready(out)
    out_np = np.asarray(out)

    # Reference 1: contracted composite in plain numpy (row-batched).
    ref_chain = mlp_ref(composite, xy)

    # Reference 2: intended semantics [ReLU(V(x)) - ReLU(V(A(x,P(x))+y)), ||y||_1].
    x_, y_ = xy[:, :DIM], xy[:, DIM:]
    Px = mlp_ref(P, x_)
    Axy = mlp_ref(A, np.concatenate([x_, Px], axis=-1))
    z = Axy + y_
    v1 = np.maximum(mlp_ref(V, x_), 0.0)
    v2 = np.maximum(mlp_ref(V, z), 0.0)
    ref_sem = np.concatenate([v1 - v2, np.abs(y_).sum(axis=-1, keepdims=True)], axis=-1)

    assert out_np.shape == (B, 2)
    np.testing.assert_allclose(out_np, ref_chain, rtol=2e-3, atol=2e-3)
    np.testing.assert_allclose(out_np, ref_sem, rtol=1e-2, atol=1e-2)

    print("KERNEL_OK")
</pallas_src>

<mosaic_0001>
module attributes {stable_mosaic.version = 11 : i64} {
  func.func @composite_kernel(%arg0: i32, %arg1: memref<256x16xf32, #tpu.memory_space<vmem>>, %arg2: memref<16x128xf32, #tpu.memory_space<vmem>>, %arg3: memref<5x128x128xf32, #tpu.memory_space<vmem>>, %arg4: memref<8x128xf32, #tpu.memory_space<vmem>>, %arg5: memref<256x128xf32, #tpu.memory_space<vmem>>) attributes {dimension_semantics = [#tpu.dimension_semantics<parallel>], iteration_bounds = array<i64: 2>, scalar_prefetch = 0 : i64, scratch_operands = 0 : i64, tpu.core_type = #tpu.core_type<tc>, window_params = [{transform_indices = @transform_0, window_bounds = array<i64: 256, 16>}, {pipeline_mode = #tpu.pipeline_mode<synchronous>, transform_indices = @transform_1, window_bounds = array<i64: 16, 128>}, {pipeline_mode = #tpu.pipeline_mode<synchronous>, transform_indices = @transform_2, window_bounds = array<i64: 5, 128, 128>}, {pipeline_mode = #tpu.pipeline_mode<synchronous>, transform_indices = @transform_3, window_bounds = array<i64: 8, 128>}, {transform_indices = @transform_4, window_bounds = array<i64: 256, 128>}]} {
    %c0 = arith.constant 0 : index
    %c0_0 = arith.constant 0 : index
    %0 = vector.load %arg1[%c0, %c0_0] : memref<256x16xf32, #tpu.memory_space<vmem>>, vector<256x16xf32>
    %c0_1 = arith.constant 0 : index
    %c0_2 = arith.constant 0 : index
    %1 = vector.load %arg2[%c0_1, %c0_2] : memref<16x128xf32, #tpu.memory_space<vmem>>, vector<16x128xf32>
    %cst = arith.constant dense<0.000000e+00> : vector<256x128xf32>
    %2 = tpu.matmul %0, %1, %cst {dimension_numbers = #tpu.dot_dimension_numbers<[1], [0], [0], [1], [0, 0, 1, 1], [], []>} : vector<256x16xf32>, vector<16x128xf32>, vector<256x128xf32> -> vector<256x128xf32>
    %c0_3 = arith.constant 0 : index
    %c0_4 = arith.constant 0 : index
    %3 = vector.load %arg4[%c0_3, %c0_4] : memref<8x128xf32, #tpu.memory_space<vmem>>, vector<1x128xf32>
    %4 = vector.broadcast %3 : vector<1x128xf32> to vector<256x128xf32>
    %5 = arith.addf %2, %4 : vector<256x128xf32>
    %cst_5 = arith.constant 0.000000e+00 : f32
    %6 = vector.broadcast %cst_5 : f32 to vector<256x128xf32>
    %7 = arith.maximumf %5, %6 : vector<256x128xf32>
    %c0_6 = arith.constant 0 : index
    %c0_7 = arith.constant 0 : index
    %c0_8 = arith.constant 0 : index
    %8 = vector.load %arg3[%c0_6, %c0_7, %c0_8] : memref<5x128x128xf32, #tpu.memory_space<vmem>>, vector<1x128x128xf32>
    %9 = vector.shape_cast %8 : vector<1x128x128xf32> to vector<128x128xf32>
    %cst_9 = arith.constant dense<0.000000e+00> : vector<256x128xf32>
    %10 = tpu.matmul %7, %9, %cst_9 {dimension_numbers = #tpu.dot_dimension_numbers<[1], [0], [0], [1], [0, 0, 1, 1], [], []>} : vector<256x128xf32>, vector<128x128xf32>, vector<256x128xf32> -> vector<256x128xf32>
    %c1 = arith.constant 1 : index
    %c0_10 = arith.constant 0 : index
    %11 = vector.load %arg4[%c1, %c0_10] : memref<8x128xf32, #tpu.memory_space<vmem>>, vector<1x128xf32>
    %12 = vector.broadcast %11 : vector<1x128xf32> to vector<256x128xf32>
    %13 = arith.addf %10, %12 : vector<256x128xf32>
    %cst_11 = arith.constant 0.000000e+00 : f32
    %14 = vector.broadcast %cst_11 : f32 to vector<256x128xf32>
    %15 = arith.maximumf %13, %14 : vector<256x128xf32>
    %c1_12 = arith.constant 1 : index
    %c0_13 = arith.constant 0 : index
    %c0_14 = arith.constant 0 : index
    %16 = vector.load %arg3[%c1_12, %c0_13, %c0_14] : memref<5x128x128xf32, #tpu.memory_space<vmem>>, vector<1x128x128xf32>
    %17 = vector.shape_cast %16 : vector<1x128x128xf32> to vector<128x128xf32>
    %cst_15 = arith.constant dense<0.000000e+00> : vector<256x128xf32>
    %18 = tpu.matmul %15, %17, %cst_15 {dimension_numbers = #tpu.dot_dimension_numbers<[1], [0], [0], [1], [0, 0, 1, 1], [], []>} : vector<256x128xf32>, vector<128x128xf32>, vector<256x128xf32> -> vector<256x128xf32>
    %c2 = arith.constant 2 : index
    %c0_16 = arith.constant 0 : index
    %19 = vector.load %arg4[%c2, %c0_16] : memref<8x128xf32, #tpu.memory_space<vmem>>, vector<1x128xf32>
    %20 = vector.broadcast %19 : vector<1x128xf32> to vector<256x128xf32>
    %21 = arith.addf %18, %20 : vector<256x128xf32>
    %cst_17 = arith.constant 0.000000e+00 : f32
    %22 = vector.broadcast %cst_17 : f32 to vector<256x128xf32>
    %23 = arith.maximumf %21, %22 : vector<256x128xf32>
    %c2_18 = arith.constant 2 : index
    %c0_19 = arith.constant 0 : index
    %c0_20 = arith.constant 0 : index
    %24 = vector.load %arg3[%c2_18, %c0_19, %c0_20] : memref<5x128x128xf32, #tpu.memory_space<vmem>>, vector<1x128x128xf32>
    %25 = vector.shape_cast %24 : vector<1x128x128xf32> to vector<128x128xf32>
    %cst_21 = arith.constant dense<0.000000e+00> : vector<256x128xf32>
    %26 = tpu.matmul %23, %25, %cst_21 {dimension_numbers = #tpu.dot_dimension_numbers<[1], [0], [0], [1], [0, 0, 1, 1], [], []>} : vector<256x128xf32>, vector<128x128xf32>, vector<256x128xf32> -> vector<256x128xf32>
    %c3 = arith.constant 3 : index
    %c0_22 = arith.constant 0 : index
    %27 = vector.load %arg4[%c3, %c0_22] : memref<8x128xf32, #tpu.memory_space<vmem>>, vector<1x128xf32>
    %28 = vector.broadcast %27 : vector<1x128xf32> to vector<256x128xf32>
    %29 = arith.addf %26, %28 : vector<256x128xf32>
    %cst_23 = arith.constant 0.000000e+00 : f32
    %30 = vector.broadcast %cst_23 : f32 to vector<256x128xf32>
    %31 = arith.maximumf %29, %30 : vector<256x128xf32>
    %c3_24 = arith.constant 3 : index
    %c0_25 = arith.constant 0 : index
    %c0_26 = arith.constant 0 : index
    %32 = vector.load %arg3[%c3_24, %c0_25, %c0_26] : memref<5x128x128xf32, #tpu.memory_space<vmem>>, vector<1x128x128xf32>
    %33 = vector.shape_cast %32 : vector<1x128x128xf32> to vector<128x128xf32>
    %cst_27 = arith.constant dense<0.000000e+00> : vector<256x128xf32>
    %34 = tpu.matmul %31, %33, %cst_27 {dimension_numbers = #tpu.dot_dimension_numbers<[1], [0], [0], [1], [0, 0, 1, 1], [], []>} : vector<256x128xf32>, vector<128x128xf32>, vector<256x128xf32> -> vector<256x128xf32>
    %c4 = arith.constant 4 : index
    %c0_28 = arith.constant 0 : index
    %35 = vector.load %arg4[%c4, %c0_28] : memref<8x128xf32, #tpu.memory_space<vmem>>, vector<1x128xf32>
    %36 = vector.broadcast %35 : vector<1x128xf32> to vector<256x128xf32>
    %37 = arith.addf %34, %36 : vector<256x128xf32>
    %cst_29 = arith.constant 0.000000e+00 : f32
    %38 = vector.broadcast %cst_29 : f32 to vector<256x128xf32>
    %39 = arith.maximumf %37, %38 : vector<256x128xf32>
    %c4_30 = arith.constant 4 : index
    %c0_31 = arith.constant 0 : index
    %c0_32 = arith.constant 0 : index
    %40 = vector.load %arg3[%c4_30, %c0_31, %c0_32] : memref<5x128x128xf32, #tpu.memory_space<vmem>>, vector<1x128x128xf32>
    %41 = vector.shape_cast %40 : vector<1x128x128xf32> to vector<128x128xf32>
    %cst_33 = arith.constant dense<0.000000e+00> : vector<256x128xf32>
    %42 = tpu.matmul %39, %41, %cst_33 {dimension_numbers = #tpu.dot_dimension_numbers<[1], [0], [0], [1], [0, 0, 1, 1], [], []>} : vector<256x128xf32>, vector<128x128xf32>, vector<256x128xf32> -> vector<256x128xf32>
    %c5 = arith.constant 5 : index
    %c0_34 = arith.constant 0 : index
    %43 = vector.load %arg4[%c5, %c0_34] : memref<8x128xf32, #tpu.memory_space<vmem>>, vector<1x128xf32>
    %44 = vector.broadcast %43 : vector<1x128xf32> to vector<256x128xf32>
    %45 = arith.addf %42, %44 : vector<256x128xf32>
    %c0_35 = arith.constant 0 : index
    %c0_36 = arith.constant 0 : index
    %46 = vector.load %arg5[%c0_35, %c0_36] : memref<256x128xf32, #tpu.memory_space<vmem>>, vector<256x128xf32>
    tpu.vector_store %arg5[%c0_35, %c0_36], %45 {strides = array<i32>} : memref<256x128xf32, #tpu.memory_space<vmem>>, vector<256x128xf32>,
    return
  }
  func.func @transform_0(%arg0: i32) -> (i32, i32) {
    %c0_i32 = arith.constant 0 : i32
    %c0_i32_0 = arith.constant 0 : i32
    return %arg0, %c0_i32 : i32, i32
  }
  func.func @transform_1(%arg0: i32) -> (i32, i32) {
    %c0_i32 = arith.constant 0 : i32
    %c0_i32_0 = arith.constant 0 : i32
    %c0_i32_1 = arith.constant 0 : i32
    return %c0_i32, %c0_i32_0 : i32, i32
  }
  func.func @transform_2(%arg0: i32) -> (i32, i32, i32) {
    %c0_i32 = arith.constant 0 : i32
    %c0_i32_0 = arith.constant 0 : i32
    %c0_i32_1 = arith.constant 0 : i32
    %c0_i32_2 = arith.constant 0 : i32
    return %c0_i32, %c0_i32_0, %c0_i32_1 : i32, i32, i32
  }
  func.func @transform_3(%arg0: i32) -> (i32, i32) {
    %c0_i32 = arith.constant 0 : i32
    %c0_i32_0 = arith.constant 0 : i32
    %c0_i32_1 = arith.constant 0 : i32
    return %c0_i32, %c0_i32_0 : i32, i32
  }
  func.func @transform_4(%arg0: i32) -> (i32, i32) {
    %c0_i32 = arith.constant 0 : i32
    %c0_i32_0 = arith.constant 0 : i32
    return %arg0, %c0_i32 : i32, i32
  }
}

</mosaic_0001>

<llo_original>
// kernel: tpu_custom_call.1
$region0: #{tpu_custom_call.1}
  #allocation0 [shape = 'u32[]', space=smem, size = 0x4, offset = 0x4, fixed_abs, tag = 'smem constant byte address 0x4 - core index']
  #allocation1 [shape = 'u32[144,128]{1,0:T(1,128)}', space=vmem, size = 0x12000, scoped, tag = 'internal scratch']
  %s0 = inlined_call_operand.vmem [shape: f32[512,16], index: 0, kind: input, shape index: {}]
  %s1 = inlined_call_operand.vmem [shape: f32[16,128], index: 1, kind: input, shape index: {}]
  %s2 = inlined_call_operand.hbm [shape: f32[5,128,128], index: 2, kind: input, shape index: {}]
  %s3 = inlined_call_operand.vmem [shape: f32[8,128], index: 3, kind: input, shape index: {}]
  %s4 = inlined_call_operand.hbm [shape: f32[512,128], index: 4, kind: output, shape index: {}]
  %s5 = sld [smem:[#allocation0]]
  $region53: #{tpu_custom_call.1} parent=0
    _
  %s7 = ssub.s32 1, %s5
  %s8 = scalar_select 0, %s7, %s5
  $region1: #{tpu_custom_call.1} parent=0
    #allocation2 [shape = 'u8[327680]{0}', space=vmem, size = 0x50000, scoped, tag = 'input window, operand 2, single buffered']
    #allocation3 [shape = 's32[2]{0}', space=sflag, size = 0x8, scoped, tag = 'scoped memory for tpu_custom_call.1']
    #allocation4 [shape = 's32[2]{0}', space=sflag, size = 0x8, scoped, tag = 'scoped memory for tpu_custom_call.1']
    #allocation5 [shape = 'u8[262144]{0}', space=vmem, size = 0x40000, scoped, tag = 'output window, operand 0']
    %9 = vsyncpa [#allocation3], 0
    %10 = vsyncpa [#allocation4], 0
    %s11 = scalar_lea.sflag [#allocation4], 1
    %12 = vsyncpa %s11, 0
    loop: start=0, step=1, limit=4
    $region2: #{tpu_custom_call.1} parent=1 // loop_pre_header
      _
    $region3: #{tpu_custom_call.1} parent=1 // loop_header
      %s14 = sphi 0, %s18
      %p15 = scmp.ge.s32.totalorder %s14, 4
      %s24 = sphi 0, %s26
      %s27 = sphi 0, %s24
      %s28 = sphi 0, %s27
      %s44 = sphi 0, %s28
      %s48 = sphi 0, %s48
      %s50 = sphi 0, %s48
      %s51 = sphi 0, %s50
      %s65 = sphi 0, %s51
      %s69 = sphi 0, %s69
      %s71 = sphi 0, %s69
      %s72 = sphi 0, %s71
      %s86 = sphi 0, %s72
      %s90 = sphi 0, %s90
      %s92 = sphi 0, %s90
      %s93 = sphi 0, %s92
      %s107 = sphi 0, %s93
      %s113 = sphi 0, %s115
      %s116 = sphi 0, %s113
      %s117 = sphi 0, %s116
      %s133 = sphi 0, %s117
    $region4: #{tpu_custom_call.1} parent=1 // loop_header_branch
      %17 = sbr.rel (%p15) target = $region8
    $region5: #{tpu_custom_call.1} parent=1 // loop_body
      %s19 = ssub.s32 %s14, 1
      %s20 = ssub.s32 %s14, 2
      %s21 = sadd.s32 %s14, 1
      %s22 = ssub.s32 %s14, %s21
      %p23 = scmp.eq.s32.totalorder %s22, 0
      %s25 = sadd.s32 %s24, 1
      %s26 = scalar_select %p23, %s24, %s25
      %p29 = pneg %p23
      %p30 = scmp.eq.s32.totalorder %s14, 1
      %p31 = por %p29, %p30
      %p32 = scmp.ne.s32.totalorder %s24, %s27
      %p33 = scmp.eq.s32.totalorder %s14, 0
      %p34 = por %p32, %p33
      %p35 = scmp.ne.s32.totalorder %s24, %s27
      %p36 = scmp.eq.s32.totalorder %s19, 1
      %p37 = por %p35, %p36
      %p38 = scmp.ne.s32.totalorder %s27, %s28
      %p39 = scmp.eq.s32.totalorder %s19, 0
      %p40 = por %p38, %p39
      %p41 = scmp.ne.s32.totalorder %s27, %s28
      %p42 = scmp.eq.s32.totalorder %s20, 1
      %p43 = por %p41, %p42
      %p45 = scmp.ne.s32.totalorder %s28, %s44
      %p46 = scmp.eq.s32.totalorder %s20, 0
      %p47 = por %p45, %p46
      %s49 = sadd.s32 %s48, 1
      %p52 = scmp.eq.s32.totalorder %s14, 1
      %p53 = scmp.ne.s32.totalorder %s48, %s50
      %p54 = scmp.eq.s32.totalorder %s14, 0
      %p55 = por %p53, %p54
      %p56 = scmp.ne.s32.totalorder %s48, %s50
      %p57 = scmp.eq.s32.totalorder %s19, 1
      %p58 = por %p56, %p57
      %p59 = scmp.ne.s32.totalorder %s50, %s51
      %p60 = scmp.eq.s32.totalorder %s19, 0
      %p61 = por %p59, %p60
      %p62 = scmp.ne.s32.totalorder %s50, %s51
      %p63 = scmp.eq.s32.totalorder %s20, 1
      %p64 = por %p62, %p63
      %p66 = scmp.ne.s32.totalorder %s51, %s65
      %p67 = scmp.eq.s32.totalorder %s20, 0
      %p68 = por %p66, %p67
      %s70 = sadd.s32 %s69, 1
      %p73 = scmp.eq.s32.totalorder %s14, 1
      %p74 = scmp.ne.s32.totalorder %s69, %s71
      %p75 = scmp.eq.s32.totalorder %s14, 0
      %p76 = por %p74, %p75
      %p77 = scmp.ne.s32.totalorder %s69, %s71
      %p78 = scmp.eq.s32.totalorder %s19, 1
      %p79 = por %p77, %p78
      %p80 = scmp.ne.s32.totalorder %s71, %s72
      %p81 = scmp.eq.s32.totalorder %s19, 0
      %p82 = por %p80, %p81
      %p83 = scmp.ne.s32.totalorder %s71, %s72
      %p84 = scmp.eq.s32.totalorder %s20, 1
      %p85 = por %p83, %p84
      %p87 = scmp.ne.s32.totalorder %s72, %s86
      %p88 = scmp.eq.s32.totalorder %s20, 0
      %p89 = por %p87, %p88
      %s91 = sadd.s32 %s90, 1
      %p94 = scmp.eq.s32.totalorder %s14, 1
      %p95 = scmp.ne.s32.totalorder %s90, %s92
      %p96 = scmp.eq.s32.totalorder %s14, 0
      %p97 = por %p95, %p96
      %p98 = scmp.ne.s32.totalorder %s90, %s92
      %p99 = scmp.eq.s32.totalorder %s19, 1
      %p100 = por %p98, %p99
      %p101 = scmp.ne.s32.totalorder %s92, %s93
      %p102 = scmp.eq.s32.totalorder %s19, 0
      %p103 = por %p101, %p102
      %p104 = scmp.ne.s32.totalorder %s92, %s93
      %p105 = scmp.eq.s32.totalorder %s20, 1
      %p106 = por %p104, %p105
      %p108 = scmp.ne.s32.totalorder %s93, %s107
      %p109 = scmp.eq.s32.totalorder %s20, 0
      %p110 = por %p108, %p109
      %s111 = ssub.s32 %s14, %s21
      %p112 = scmp.eq.s32.totalorder %s111, 0
      %s114 = sadd.s32 %s113, 1
      %s115 = scalar_select %p112, %s113, %s114
      %p118 = pneg %p112
      %p119 = scmp.eq.s32.totalorder %s14, 1
      %p120 = por %p118, %p119
      %p121 = scmp.ne.s32.totalorder %s113, %s116
      %p122 = scmp.eq.s32.totalorder %s14, 0
      %p123 = por %p121, %p122
      %p124 = scmp.ne.s32.totalorder %s113, %s116
      %p125 = scmp.eq.s32.totalorder %s19, 1
      %p126 = por %p124, %p125
      %p127 = scmp.ne.s32.totalorder %s116, %s117
      %p128 = scmp.eq.s32.totalorder %s19, 0
      %p129 = por %p127, %p128
      %p130 = scmp.ne.s32.totalorder %s116, %s117
      %p131 = scmp.eq.s32.totalorder %s20, 1
      %p132 = por %p130, %p131
      %p134 = scmp.ne.s32.totalorder %s117, %s133
      %p135 = scmp.eq.s32.totalorder %s20, 0
      %p136 = por %p134, %p135
      %p137 = scmp.le.s32.totalorder 1, %s14
      %p138 = scmp.lt.s32.totalorder %s14, 3
      %p139 = pnand %p137, %p138
      %p140 = pneg %p139
      // Predicated region
      $region9: #{tpu_custom_call.1} parent=5 // pred_check
        _
      $region10: #{tpu_custom_call.1} parent=5 // pred_check_branch
        %142 = sbr.rel (%p139) target = $region12
      $region11: #{tpu_custom_call.1} parent=5 // pred_region
        %s143 = ssub.s32 %s14, 1
        // Predicated region
        $region13: #{tpu_custom_call.1} parent=11 // pred_check
          %p144 = pneg %p61
        $region14: #{tpu_custom_call.1} parent=11 // pred_check_branch
          %146 = sbr.rel (%p144) target = $region16
        $region15: #{tpu_custom_call.1} parent=11 // pred_region
          _
        $region16: #{tpu_custom_call.1} parent=11 // pred_fallthru
          _
        // Predicated region
        $region17: #{tpu_custom_call.1} parent=11 // pred_check
          %p147 = pneg %p82
        $region18: #{tpu_custom_call.1} parent=11 // pred_check_branch
          %149 = sbr.rel (%p147) target = $region20
        $region19: #{tpu_custom_call.1} parent=11 // pred_region
          %s151 = ssub.s32 10240, 10240
          %152 = vsyncadd [#allocation3], %s151
          %s153 = sshll.u32 [#allocation2], 4
          %s154 = int_to_ptr.vmem [resolvable:$true] %s153
          %159 = dma.hbm_to_vmem [thread:$0]  %s2, 10240, %s154, [#allocation3], 128, 128, 8
        $region20: #{tpu_custom_call.1} parent=11 // pred_fallthru
          _
        // Predicated region
        $region21: #{tpu_custom_call.1} parent=11 // pred_check
          %p160 = pneg %p103
        $region22: #{tpu_custom_call.1} parent=11 // pred_check_branch
          %162 = sbr.rel (%p160) target = $region24
        $region23: #{tpu_custom_call.1} parent=11 // pred_region
          _
        $region24: #{tpu_custom_call.1} parent=11 // pred_fallthru
          _
      $region12: #{tpu_custom_call.1} parent=5 // pred_fallthru
        _
      %p163 = scmp.lt.s32.totalorder %s14, 2
      // Predicated region
      $region25: #{tpu_custom_call.1} parent=5 // pred_check
        %p164 = pneg %p163
      $region26: #{tpu_custom_call.1} parent=5 // pred_check_branch
        %166 = sbr.rel (%p164) target = $region28
      $region27: #{tpu_custom_call.1} parent=5 // pred_region
        // Predicated region
        $region29: #{tpu_custom_call.1} parent=27 // pred_check
          %p167 = pneg %p34
        $region30: #{tpu_custom_call.1} parent=27 // pred_check_branch
          %169 = sbr.rel (%p167) target = $region32
        $region31: #{tpu_custom_call.1} parent=27 // pred_region
          %s170 = smul.u32 32, %s14
          %p171 = scmp.lt.s32.totalorder %s170, 63
          %s172 = scalar_select %p171, %s170, 63
          %s173 = smul.addr %s172, 8
          %s174 = scalar_lea.vmem %s0, %s173
          %s175 = smul.u32 32, %s14
        $region32: #{tpu_custom_call.1} parent=27 // pred_fallthru
          _
      $region28: #{tpu_custom_call.1} parent=5 // pred_fallthru
        _
      %p176 = scmp.le.s32.totalorder 1, %s14
      %p177 = scmp.lt.s32.totalorder %s14, 3
      %p178 = pnand %p176, %p177
      %p179 = pneg %p178
      // Predicated region
      $region33: #{tpu_custom_call.1} parent=5 // pred_check
        _
      $region34: #{tpu_custom_call.1} parent=5 // pred_check_branch
        %181 = sbr.rel (%p178) target = $region36
      $region35: #{tpu_custom_call.1} parent=5 // pred_region
        %s182 = ssub.s32 %s14, 1
        // Predicated region
        $region37: #{tpu_custom_call.1} parent=35 // pred_check
          %p183 = pneg %p82
        $region38: #{tpu_custom_call.1} parent=35 // pred_check_branch
          %185 = sbr.rel (%p183) target = $region40
        $region39: #{tpu_custom_call.1} parent=35 // pred_region
          %186 = dma.done [#allocation3], 10240
        $region40: #{tpu_custom_call.1} parent=35 // pred_fallthru
          _
        %s187 = smul.u32 32, %s19
        %p188 = scmp.lt.s32.totalorder %s187, 63
        %s189 = scalar_select %p188, %s187, 63
        %s190 = smul.addr %s189, 8
        %s191 = scalar_lea.vmem %s0, %s190
        %p192 = pneg %p40
        %p193 = pneg %p37
        %p194 = pneg %p61
        %p195 = pneg %p58
        %p196 = pneg %p82
        %p197 = pneg %p79
        %p198 = pneg %p103
        %p199 = pneg %p100
        %p200 = pneg %p129
        %p201 = pneg %p126
        %s202 = sand.u32 %s116, 1
        %s203 = scalar_lea.sflag [#allocation4], %s202
        %s204 = sand.u32 %s116, 1
        %s205 = smul.addr %s204, 256
        %s206 = scalar_lea.vmem [#allocation5], %s205
        %s207 = smul.u32 32, %s19
        %p208 = scmp.lt.s32.totalorder %s207, 63
        %s209 = scalar_select %p208, %s207, 63
        %s210 = smul.addr %s209, 8
        %s211 = scalar_lea.vmem %s0, %s210
        %s212 = smul.u32 32, %s19
        %s213 = smul.u32 32, %s19
        %v214 = vld [vmem:[%s211] sm:$0xff]
        %v215 = vld [vmem:[%s211 + $0x8] sm:$0xff]
        %v216 = vld [vmem:[%s211 + $0x10] sm:$0xff]
        %v217 = vld [vmem:[%s211 + $0x18] sm:$0xff]
        %v218 = vld [vmem:[%s211 + $0x20] sm:$0xff]
        %v219 = vld [vmem:[%s211 + $0x28] sm:$0xff]
        %v220 = vld [vmem:[%s211 + $0x30] sm:$0xff]
        %v221 = vld [vmem:[%s211 + $0x38] sm:$0xff]
        %v222 = vld [vmem:[%s211 + $0x40] sm:$0xff]
        %v223 = vld [vmem:[%s211 + $0x48] sm:$0xff]
        %v224 = vld [vmem:[%s211 + $0x50] sm:$0xff]
        %v225 = vld [vmem:[%s211 + $0x58] sm:$0xff]
        %v226 = vld [vmem:[%s211 + $0x60] sm:$0xff]
        %v227 = vld [vmem:[%s211 + $0x68] sm:$0xff]
        %v228 = vld [vmem:[%s211 + $0x70] sm:$0xff]
        %v229 = vld [vmem:[%s211 + $0x78] sm:$0xff]
        %v230 = vld [vmem:[%s211 + $0x80] sm:$0xff]
        %v231 = vld [vmem:[%s211 + $0x88] sm:$0xff]
        %v232 = vld [vmem:[%s211 + $0x90] sm:$0xff]
        %v233 = vld [vmem:[%s211 + $0x98] sm:$0xff]
        %v234 = vld [vmem:[%s211 + $0xa0] sm:$0xff]
        %v235 = vld [vmem:[%s211 + $0xa8] sm:$0xff]
        %v236 = vld [vmem:[%s211 + $0xb0] sm:$0xff]
        %v237 = vld [vmem:[%s211 + $0xb8] sm:$0xff]
        %v238 = vld [vmem:[%s211 + $0xc0] sm:$0xff]
        %v239 = vld [vmem:[%s211 + $0xc8] sm:$0xff]
        %v240 = vld [vmem:[%s211 + $0xd0] sm:$0xff]
        %v241 = vld [vmem:[%s211 + $0xd8] sm:$0xff]
        %v242 = vld [vmem:[%s211 + $0xe0] sm:$0xff]
        %v243 = vld [vmem:[%s211 + $0xe8] sm:$0xff]
        %v244 = vld [vmem:[%s211 + $0xf0] sm:$0xff]
        %v245 = vld [vmem:[%s211 + $0xf8] sm:$0xff]
        %v246 = vld [vmem:[%s1] sm:$0xff]
        %v247 = vld [vmem:[%s1 + $0x8] sm:$0xff]
        %v248 = vld [vmem:[%s3] sm:$0x1]
        %v249 = vlaneseq
        %v250 = vshrl.u32 %v249, 7
        %v251 = vsub.s32 0, %v250
        %v252 = vrot.slane %v248, %v251
        %vm253 = vcmask 130048
        %v255 = vsel %vm253, %v214, 0
        %v258 = vsel %vm253, %v215, 0
        %v261 = vsel %vm253, %v216, 0
        %v264 = vsel %vm253, %v217, 0
        %v267 = vsel %vm253, %v218, 0
        %v270 = vsel %vm253, %v219, 0
        %v273 = vsel %vm253, %v220, 0
        %v276 = vsel %vm253, %v221, 0
        %v279 = vsel %vm253, %v222, 0
        %v282 = vsel %vm253, %v223, 0
        %v285 = vsel %vm253, %v224, 0
        %v288 = vsel %vm253, %v225, 0
        %v291 = vsel %vm253, %v226, 0
        %v294 = vsel %vm253, %v227, 0
        %v297 = vsel %vm253, %v228, 0
        %v300 = vsel %vm253, %v229, 0
        %v303 = vsel %vm253, %v230, 0
        %v306 = vsel %vm253, %v231, 0
        %v309 = vsel %vm253, %v232, 0
        %v312 = vsel %vm253, %v233, 0
        %v315 = vsel %vm253, %v234, 0
        %v318 = vsel %vm253, %v235, 0
        %v321 = vsel %vm253, %v236, 0
        %v324 = vsel %vm253, %v237, 0
        %v327 = vsel %vm253, %v238, 0
        %v330 = vsel %vm253, %v239, 0
        %v333 = vsel %vm253, %v240, 0
        %v336 = vsel %vm253, %v241, 0
        %v339 = vsel %vm253, %v242, 0
        %v342 = vsel %vm253, %v243, 0
        %v345 = vsel %vm253, %v244, 0
        %v348 = vsel %vm253, %v245, 0
        %350 = vmatprep.subr.mxu0 0.0
        %351 = vmatpush1.msra.mxu0 %v246
        %352 = vmatprep.subr.mxu0 0.0
        %353 = vmatpush1.msra.mxu0 %v247
        %354 = vmatprep.subr.mxu0 0.0
        %355 = vmatpush1.msra.mxu0 0.0
        %356 = vmatprep.subr.mxu0 0.0
        %357 = vmatpush1.msra.mxu0 0.0
        %358 = vmatprep.subr.mxu0 0.0
        %359 = vmatpush1.msra.mxu0 0.0
        %360 = vmatprep.subr.mxu0 0.0
        %361 = vmatpush1.msra.mxu0 0.0
        %362 = vmatprep.subr.mxu0 0.0
        %363 = vmatpush1.msra.mxu0 0.0
        %364 = vmatprep.subr.mxu0 0.0
        %365 = vmatpush1.msra.mxu0 0.0
        %366 = vmatprep.subr.mxu0 0.0
        %367 = vmatpush1.msra.mxu0 0.0
        %368 = vmatprep.subr.mxu0 0.0
        %369 = vmatpush1.msra.mxu0 0.0
        %370 = vmatprep.subr.mxu0 0.0
        %371 = vmatpush1.msra.mxu0 0.0
        %372 = vmatprep.subr.mxu0 0.0
        %373 = vmatpush1.msra.mxu0 0.0
        %374 = vmatprep.subr.mxu0 0.0
        %375 = vmatpush1.msra.mxu0 0.0
        %376 = vmatprep.subr.mxu0 0.0
        %377 = vmatpush1.msra.mxu0 0.0
        %378 = vmatprep.subr.mxu0 0.0
        %379 = vmatpush1.msra.mxu0 0.0
        %380 = vmatprep.subr.mxu0 0.0
        %381 = vmatpush1.msra.mxu0 0.0
        %382 = vmatprep.subr.mxu0 0.0
        %383 = vmatpush1.msra.mxu0 0.0
        %384 = vmatprep.subr.mxu0 0.0
        %385 = vmatpush1.msra.mxu0 0.0
        %386 = vmatprep.subr.mxu0 0.0
        %387 = vmatpush1.msra.mxu0 0.0
        %388 = vmatprep.subr.mxu0 0.0
        %389 = vmatpush1.msra.mxu0 0.0
        %390 = vmatprep.subr.mxu0 0.0
        %391 = vmatpush1.msra.mxu0 0.0
        %392 = vmatprep.subr.mxu0 0.0
        %393 = vmatpush1.msra.mxu0 0.0
        %394 = vmatprep.subr.mxu0 0.0
        %395 = vmatpush1.msra.mxu0 0.0
        %396 = vmatprep.subr.mxu0 0.0
        %397 = vmatpush1.msra.mxu0 0.0
        %398 = vmatprep.subr.mxu0 0.0
        %399 = vmatpush1.msra.mxu0 0.0
        %400 = vmatprep.subr.mxu0 0.0
        %401 = vmatpush1.msra.mxu0 0.0
        %402 = vmatprep.subr.mxu0 0.0
        %403 = vmatpush1.msra.mxu0 0.0
        %404 = vmatprep.subr.mxu0 0.0
        %405 = vmatpush1.msra.mxu0 0.0
        %406 = vmatprep.subr.mxu0 0.0
        %407 = vmatpush1.msra.mxu0 0.0
        %408 = vmatprep.subr.mxu0 0.0
        %409 = vmatpush1.msra.mxu0 0.0
        %410 = vmatprep.subr.mxu0 0.0
        %411 = vmatpush1.msra.mxu0 0.0
        %412 = vmatprep.subr.mxu0 0.0
        %413 = vmatpush1.msra.mxu0 0.0
        %414 = vmatprep.mubr.f32.mxu0 0.0
        %415 = vmatmul.mubr.f32.gmra.mrb[0].mxu0 %v255
        %v416 = vpop.f32.mrb[0].mxu0
        %v417 = vadd.f32 %v252, %v416
        %v418 = vpop.f32.mrb[0].mxu0
        %419 = vmatprep.mubr.f32.mxu0 0.0
        %420 = vmatmul.mubr.f32.gmra.mrb[0].mxu0 %v258
        %v421 = vpop.f32.mrb[0].mxu0
        %v422 = vadd.f32 %v252, %v421
        %v423 = vpop.f32.mrb[0].mxu0
        %424 = vmatprep.mubr.f32.mxu0 0.0
        %425 = vmatmul.mubr.f32.gmra.mrb[0].mxu0 %v261
        %v426 = vpop.f32.mrb[0].mxu0
        %v427 = vadd.f32 %v252, %v426
        %v428 = vpop.f32.mrb[0].mxu0
        %429 = vmatprep.mubr.f32.mxu0 0.0
        %430 = vmatmul.mubr.f32.gmra.mrb[0].mxu0 %v264
        %v431 = vpop.f32.mrb[0].mxu0
        %v432 = vadd.f32 %v252, %v431
        %v433 = vpop.f32.mrb[0].mxu0
        %434 = vmatprep.mubr.f32.mxu0 0.0
        %435 = vmatmul.mubr.f32.gmra.mrb[0].mxu0 %v267
        %v436 = vpop.f32.mrb[0].mxu0
        %v437 = vadd.f32 %v252, %v436
        %v438 = vpop.f32.mrb[0].mxu0
        %439 = vmatprep.mubr.f32.mxu0 0.0
        %440 = vmatmul.mubr.f32.gmra.mrb[0].mxu0 %v270
        %v441 = vpop.f32.mrb[0].mxu0
        %v442 = vadd.f32 %v252, %v441
        %v443 = vpop.f32.mrb[0].mxu0
        %444 = vmatprep.mubr.f32.mxu0 0.0
        %445 = vmatmul.mubr.f32.gmra.mrb[0].mxu0 %v273
        %v446 = vpop.f32.mrb[0].mxu0
        %v447 = vadd.f32 %v252, %v446
        %v448 = vpop.f32.mrb[0].mxu0
        %449 = vmatprep.mubr.f32.mxu0 0.0
        %450 = vmatmul.mubr.f32.gmra.mrb[0].mxu0 %v276
        %v451 = vpop.f32.mrb[0].mxu0
        %v452 = vadd.f32 %v252, %v451
        %v453 = vpop.f32.mrb[0].mxu0
        %454 = vmatprep.mubr.f32.mxu0 0.0
        %455 = vmatmul.mubr.f32.gmra.mrb[0].mxu0 %v279
        %v456 = vpop.f32.mrb[0].mxu0
        %v457 = vadd.f32 %v252, %v456
        %v458 = vpop.f32.mrb[0].mxu0
        %459 = vmatprep.mubr.f32.mxu0 0.0
        %460 = vmatmul.mubr.f32.gmra.mrb[0].mxu0 %v282
        %v461 = vpop.f32.mrb[0].mxu0
        %v462 = vadd.f32 %v252, %v461
        %v463 = vpop.f32.mrb[0].mxu0
        %464 = vmatprep.mubr.f32.mxu0 0.0
        %465 = vmatmul.mubr.f32.gmra.mrb[0].mxu0 %v285
        %v466 = vpop.f32.mrb[0].mxu0
        %v467 = vadd.f32 %v252, %v466
        %v468 = vpop.f32.mrb[0].mxu0
        %469 = vmatprep.mubr.f32.mxu0 0.0
        %470 = vmatmul.mubr.f32.gmra.mrb[0].mxu0 %v288
        %v471 = vpop.f32.mrb[0].mxu0
        %v472 = vadd.f32 %v252, %v471
        %v473 = vpop.f32.mrb[0].mxu0
        %474 = vmatprep.mubr.f32.mxu0 0.0
        %475 = vmatmul.mubr.f32.gmra.mrb[0].mxu0 %v291
        %v476 = vpop.f32.mrb[0].mxu0
        %v477 = vadd.f32 %v252, %v476
        %v478 = vpop.f32.mrb[0].mxu0
        %479 = vmatprep.mubr.f32.mxu0 0.0
        %480 = vmatmul.mubr.f32.gmra.mrb[0].mxu0 %v294
        %v481 = vpop.f32.mrb[0].mxu0
        %v482 = vadd.f32 %v252, %v481
        %v483 = vpop.f32.mrb[0].mxu0
        %484 = vmatprep.mubr.f32.mxu0 0.0
        %485 = vmatmul.mubr.f32.gmra.mrb[0].mxu0 %v297
        %v486 = vpop.f32.mrb[0].mxu0
        %v487 = vadd.f32 %v252, %v486
        %v488 = vpop.f32.mrb[0].mxu0
        %489 = vmatprep.mubr.f32.mxu0 0.0
        %490 = vmatmul.mubr.f32.gmra.mrb[0].mxu0 %v300
        %v491 = vpop.f32.mrb[0].mxu0
        %v492 = vadd.f32 %v252, %v491
        %v493 = vpop.f32.mrb[0].mxu0
        %494 = vmatprep.mubr.f32.mxu0 0.0
        %495 = vmatmul.mubr.f32.gmra.mrb[0].mxu0 %v303
        %v496 = vpop.f32.mrb[0].mxu0
        %v497 = vadd.f32 %v252, %v496
        %v498 = vpop.f32.mrb[0].mxu0
        %499 = vmatprep.mubr.f32.mxu0 0.0
        %500 = vmatmul.mubr.f32.gmra.mrb[0].mxu0 %v306
        %v501 = vpop.f32.mrb[0].mxu0
        %v502 = vadd.f32 %v252, %v501
        %v503 = vpop.f32.mrb[0].mxu0
        %504 = vmatprep.mubr.f32.mxu0 0.0
        %505 = vmatmul.mubr.f32.gmra.mrb[0].mxu0 %v309
        %v506 = vpop.f32.mrb[0].mxu0
        %v507 = vadd.f32 %v252, %v506
        %v508 = vpop.f32.mrb[0].mxu0
        %509 = vmatprep.mubr.f32.mxu0 0.0
        %510 = vmatmul.mubr.f32.gmra.mrb[0].mxu0 %v312
        %v511 = vpop.f32.mrb[0].mxu0
        %v512 = vadd.f32 %v252, %v511
        %v513 = vpop.f32.mrb[0].mxu0
        %514 = vmatprep.mubr.f32.mxu0 0.0
        %515 = vmatmul.mubr.f32.gmra.mrb[0].mxu0 %v315
        %v516 = vpop.f32.mrb[0].mxu0
        %v517 = vadd.f32 %v252, %v516
        %v518 = vpop.f32.mrb[0].mxu0
        %519 = vmatprep.mubr.f32.mxu0 0.0
        %520 = vmatmul.mubr.f32.gmra.mrb[0].mxu0 %v318
        %v521 = vpop.f32.mrb[0].mxu0
        %v522 = vadd.f32 %v252, %v521
        %v523 = vpop.f32.mrb[0].mxu0
        %524 = vmatprep.mubr.f32.mxu0 0.0
        %525 = vmatmul.mubr.f32.gmra.mrb[0].mxu0 %v321
        %v526 = vpop.f32.mrb[0].mxu0
        %v527 = vadd.f32 %v252, %v526
        %v528 = vpop.f32.mrb[0].mxu0
        %529 = vmatprep.mubr.f32.mxu0 0.0
        %530 = vmatmul.mubr.f32.gmra.mrb[0].mxu0 %v324
        %v531 = vpop.f32.mrb[0].mxu0
        %v532 = vadd.f32 %v252, %v531
        %v533 = vpop.f32.mrb[0].mxu0
        %534 = vmatprep.mubr.f32.mxu0 0.0
        %535 = vmatmul.mubr.f32.gmra.mrb[0].mxu0 %v327
        %v536 = vpop.f32.mrb[0].mxu0
        %v537 = vadd.f32 %v252, %v536
        %v538 = vpop.f32.mrb[0].mxu0
        %539 = vmatprep.mubr.f32.mxu0 0.0
        %540 = vmatmul.mubr.f32.gmra.mrb[0].mxu0 %v330
        %v541 = vpop.f32.mrb[0].mxu0
        %v542 = vadd.f32 %v252, %v541
        %v543 = vpop.f32.mrb[0].mxu0
        %544 = vmatprep.mubr.f32.mxu0 0.0
        %545 = vmatmul.mubr.f32.gmra.mrb[0].mxu0 %v333
        %v546 = vpop.f32.mrb[0].mxu0
        %v547 = vadd.f32 %v252, %v546
        %v548 = vpop.f32.mrb[0].mxu0
        %549 = vmatprep.mubr.f32.mxu0 0.0
        %550 = vmatmul.mubr.f32.gmra.mrb[0].mxu0 %v336
        %v551 = vpop.f32.mrb[0].mxu0
        %v552 = vadd.f32 %v252, %v551
        %v553 = vpop.f32.mrb[0].mxu0
        %554 = vmatprep.mubr.f32.mxu0 0.0
        %555 = vmatmul.mubr.f32.gmra.mrb[0].mxu0 %v339
        %v556 = vpop.f32.mrb[0].mxu0
        %v557 = vadd.f32 %v252, %v556
        %v558 = vpop.f32.mrb[0].mxu0
        %559 = vmatprep.mubr.f32.mxu0 0.0
        %560 = vmatmul.mubr.f32.gmra.mrb[0].mxu0 %v342
        %v561 = vpop.f32.mrb[0].mxu0
        %v562 = vadd.f32 %v252, %v561
        %v563 = vpop.f32.mrb[0].mxu0
        %564 = vmatprep.mubr.f32.mxu0 0.0
        %565 = vmatmul.mubr.f32.gmra.mrb[0].mxu0 %v345
        %v566 = vpop.f32.mrb[0].mxu0
        %v567 = vadd.f32 %v252, %v566
        %v568 = vpop.f32.mrb[0].mxu0
        %569 = vmatprep.mubr.f32.mxu0 0.0
        %570 = vmatmul.mubr.f32.gmra.mrb[0].mxu0 %v348
        %v571 = vpop.f32.mrb[0].mxu0
        %v572 = vadd.f32 %v252, %v571
        %v573 = vpop.f32.mrb[0].mxu0
        %574 = vdwg.mxu0
        %v575 = vmax.f32 %v417, 0.0
        %v576 = vmax.f32 %v422, 0.0
        %v577 = vmax.f32 %v427, 0.0
        %v578 = vmax.f32 %v432, 0.0
        %v579 = vmax.f32 %v437, 0.0
        %v580 = vmax.f32 %v442, 0.0
        %v581 = vmax.f32 %v447, 0.0
        %v582 = vmax.f32 %v452, 0.0
        %v583 = vmax.f32 %v457, 0.0
        %v584 = vmax.f32 %v462, 0.0
        %v585 = vmax.f32 %v467, 0.0
        %v586 = vmax.f32 %v472, 0.0
        %v587 = vmax.f32 %v477, 0.0
        %v588 = vmax.f32 %v482, 0.0
        %v589 = vmax.f32 %v487, 0.0
        %v590 = vmax.f32 %v492, 0.0
        %v591 = vmax.f32 %v497, 0.0
        %v592 = vmax.f32 %v502, 0.0
        %v593 = vmax.f32 %v507, 0.0
        %v594 = vmax.f32 %v512, 0.0
        %v595 = vmax.f32 %v517, 0.0
        %v596 = vmax.f32 %v522, 0.0
        %v597 = vmax.f32 %v527, 0.0
        %v598 = vmax.f32 %v532, 0.0
        %v599 = vmax.f32 %v537, 0.0
        %v600 = vmax.f32 %v542, 0.0
        %v601 = vmax.f32 %v547, 0.0
        %v602 = vmax.f32 %v552, 0.0
        %v603 = vmax.f32 %v557, 0.0
        %v604 = vmax.f32 %v562, 0.0
        %v605 = vmax.f32 %v567, 0.0
        %v606 = vmax.f32 %v572, 0.0
        %v607 = vld [vmem:[#allocation2] sm:$0xff]
        %v608 = vld [vmem:[#allocation2 + $0x8] sm:$0xff]
        %v609 = vld [vmem:[#allocation2 + $0x10] sm:$0xff]
        %v610 = vld [vmem:[#allocation2 + $0x18] sm:$0xff]
        %v611 = vld [vmem:[#allocation2 + $0x20] sm:$0xff]
        %v612 = vld [vmem:[#allocation2 + $0x28] sm:$0xff]
        %v613 = vld [vmem:[#allocation2 + $0x30] sm:$0xff]
        %v614 = vld [vmem:[#allocation2 + $0x38] sm:$0xff]
        %v615 = vld [vmem:[#allocation2 + $0x40] sm:$0xff]
        %v616 = vld [vmem:[#allocation2 + $0x48] sm:$0xff]
        %v617 = vld [vmem:[#allocation2 + $0x50] sm:$0xff]
        %v618 = vld [vmem:[#allocation2 + $0x58] sm:$0xff]
        %v619 = vld [vmem:[#allocation2 + $0x60] sm:$0xff]
        %v620 = vld [vmem:[#allocation2 + $0x68] sm:$0xff]
        %v621 = vld [vmem:[#allocation2 + $0x70] sm:$0xff]
        %v622 = vld [vmem:[#allocation2 + $0x78] sm:$0xff]
        %v623 = vld [vmem:[%s3 + $0x1] sm:$0x1]
        %v624 = vlaneseq
        %v625 = vshrl.u32 %v624, 7
        %v626 = vsub.s32 0, %v625
        %v627 = vrot.slane %v623, %v626
        %628 = vmatprep.subr.mxu0 0.0
        %629 = vmatpush1.msra.mxu0 %v607
        %630 = vmatprep.subr.mxu0 0.0
        %631 = vmatpush1.msra.mxu0 %v608
        %632 = vmatprep.subr.mxu0 0.0
        %633 = vmatpush1.msra.mxu0 %v609
        %634 = vmatprep.subr.mxu0 0.0
        %635 = vmatpush1.msra.mxu0 %v610
        %636 = vmatprep.subr.mxu0 0.0
        %637 = vmatpush1.msra.mxu0 %v611
        %638 = vmatprep.subr.mxu0 0.0
        %639 = vmatpush1.msra.mxu0 %v612
        %640 = vmatprep.subr.mxu0 0.0
        %641 = vmatpush1.msra.mxu0 %v613
        %642 = vmatprep.subr.mxu0 0.0
        %643 = vmatpush1.msra.mxu0 %v614
        %644 = vmatprep.subr.mxu0 0.0
        %645 = vmatpush1.msra.mxu0 %v615
        %646 = vmatprep.subr.mxu0 0.0
        %647 = vmatpush1.msra.mxu0 %v616
        %648 = vmatprep.subr.mxu0 0.0
        %649 = vmatpush1.msra.mxu0 %v617
        %650 = vmatprep.subr.mxu0 0.0
        %651 = vmatpush1.msra.mxu0 %v618
        %652 = vmatprep.subr.mxu0 0.0
        %653 = vmatpush1.msra.mxu0 %v619
        %654 = vmatprep.subr.mxu0 0.0
        %655 = vmatpush1.msra.mxu0 %v620
        %656 = vmatprep.subr.mxu0 0.0
        %657 = vmatpush1.msra.mxu0 %v621
        %658 = vmatprep.subr.mxu0 0.0
        %659 = vmatpush1.msra.mxu0 %v622
        %660 = vmatprep.subr.mxu0 0.0
        %661 = vmatpush1.msra.mxu0 0.0
        %662 = vmatprep.subr.mxu0 0.0
        %663 = vmatpush1.msra.mxu0 0.0
        %664 = vmatprep.subr.mxu0 0.0
        %665 = vmatpush1.msra.mxu0 0.0
        %666 = vmatprep.subr.mxu0 0.0
        %667 = vmatpush1.msra.mxu0 0.0
        %668 = vmatprep.subr.mxu0 0.0
        %669 = vmatpush1.msra.mxu0 0.0
        %670 = vmatprep.subr.mxu0 0.0
        %671 = vmatpush1.msra.mxu0 0.0
        %672 = vmatprep.subr.mxu0 0.0
        %673 = vmatpush1.msra.mxu0 0.0
        %674 = vmatprep.subr.mxu0 0.0
        %675 = vmatpush1.msra.mxu0 0.0
        %676 = vmatprep.subr.mxu0 0.0
        %677 = vmatpush1.msra.mxu0 0.0
        %678 = vmatprep.subr.mxu0 0.0
        %679 = vmatpush1.msra.mxu0 0.0
        %680 = vmatprep.subr.mxu0 0.0
        %681 = vmatpush1.msra.mxu0 0.0
        %682 = vmatprep.subr.mxu0 0.0
        %683 = vmatpush1.msra.mxu0 0.0
        %684 = vmatprep.subr.mxu0 0.0
        %685 = vmatpush1.msra.mxu0 0.0
        %686 = vmatprep.subr.mxu0 0.0
        %687 = vmatpush1.msra.mxu0 0.0
        %688 = vmatprep.subr.mxu0 0.0
        %689 = vmatpush1.msra.mxu0 0.0
        %690 = vmatprep.subr.mxu0 0.0
        %691 = vmatpush1.msra.mxu0 0.0
        %692 = vmatprep.mubr.f32.mxu0 0.0
        %693 = vmatmul.mubr.f32.gmra.mrb[0].mxu0 %v575
        %v694 = vpop.f32.mrb[0].mxu0
        %v695 = vadd.f32 %v627, %v694
        %v696 = vpop.f32.mrb[0].mxu0
        %697 = vmatprep.mubr.f32.mxu0 0.0
        %698 = vmatmul.mubr.f32.gmra.mrb[0].mxu0 %v576
        %v699 = vpop.f32.mrb[0].mxu0
        %v700 = vadd.f32 %v627, %v699
        %v701 = vpop.f32.mrb[0].mxu0
        %702 = vmatprep.mubr.f32.mxu0 0.0
        %703 = vmatmul.mubr.f32.gmra.mrb[0].mxu0 %v577
        %v704 = vpop.f32.mrb[0].mxu0
        %v705 = vadd.f32 %v627, %v704
        %v706 = vpop.f32.mrb[0].mxu0
        %707 = vmatprep.mubr.f32.mxu0 0.0
        %708 = vmatmul.mubr.f32.gmra.mrb[0].mxu0 %v578
        %v709 = vpop.f32.mrb[0].mxu0
        %v710 = vadd.f32 %v627, %v709
        %v711 = vpop.f32.mrb[0].mxu0
        %712 = vmatprep.mubr.f32.mxu0 0.0
        %713 = vmatmul.mubr.f32.gmra.mrb[0].mxu0 %v579
        %v714 = vpop.f32.mrb[0].mxu0
        %v715 = vadd.f32 %v627, %v714
        %v716 = vpop.f32.mrb[0].mxu0
        %717 = vmatprep.mubr.f32.mxu0 0.0
        %718 = vmatmul.mubr.f32.gmra.mrb[0].mxu0 %v580
        %v719 = vpop.f32.mrb[0].mxu0
        %v720 = vadd.f32 %v627, %v719
        %v721 = vpop.f32.mrb[0].mxu0
        %722 = vmatprep.mubr.f32.mxu0 0.0
        %723 = vmatmul.mubr.f32.gmra.mrb[0].mxu0 %v581
        %v724 = vpop.f32.mrb[0].mxu0
        %v725 = vadd.f32 %v627, %v724
        %v726 = vpop.f32.mrb[0].mxu0
        %727 = vmatprep.mubr.f32.mxu0 0.0
        %728 = vmatmul.mubr.f32.gmra.mrb[0].mxu0 %v582
        %v729 = vpop.f32.mrb[0].mxu0
        %v730 = vadd.f32 %v627, %v729
        %v731 = vpop.f32.mrb[0].mxu0
        %732 = vmatprep.mubr.f32.mxu0 0.0
        %733 = vmatmul.mubr.f32.gmra.mrb[0].mxu0 %v583
        %v734 = vpop.f32.mrb[0].mxu0
        %v735 = vadd.f32 %v627, %v734
        %v736 = vpop.f32.mrb[0].mxu0
        %737 = vmatprep.mubr.f32.mxu0 0.0
        %738 = vmatmul.mubr.f32.gmra.mrb[0].mxu0 %v584
        %v739 = vpop.f32.mrb[0].mxu0
        %v740 = vadd.f32 %v627, %v739
        %v741 = vpop.f32.mrb[0].mxu0
        %742 = vmatprep.mubr.f32.mxu0 0.0
        %743 = vmatmul.mubr.f32.gmra.mrb[0].mxu0 %v585
        %v744 = vpop.f32.mrb[0].mxu0
        %v745 = vadd.f32 %v627, %v744
        %v746 = vpop.f32.mrb[0].mxu0
        %747 = vmatprep.mubr.f32.mxu0 0.0
        %748 = vmatmul.mubr.f32.gmra.mrb[0].mxu0 %v586
        %v749 = vpop.f32.mrb[0].mxu0
        %v750 = vadd.f32 %v627, %v749
        %v751 = vpop.f32.mrb[0].mxu0
        %752 = vmatprep.mubr.f32.mxu0 0.0
        %753 = vmatmul.mubr.f32.gmra.mrb[0].mxu0 %v587
        %v754 = vpop.f32.mrb[0].mxu0
        %v755 = vadd.f32 %v627, %v754
        %v756 = vpop.f32.mrb[0].mxu0
        %757 = vmatprep.mubr.f32.mxu0 0.0
        %758 = vmatmul.mubr.f32.gmra.mrb[0].mxu0 %v588
        %v759 = vpop.f32.mrb[0].mxu0
        %v760 = vadd.f32 %v627, %v759
        %v761 = vpop.f32.mrb[0].mxu0
        %762 = vmatprep.mubr.f32.mxu0 0.0
        %763 = vmatmul.mubr.f32.gmra.mrb[0].mxu0 %v589
        %v764 = vpop.f32.mrb[0].mxu0
        %v765 = vadd.f32 %v627, %v764
        %v766 = vpop.f32.mrb[0].mxu0
        %767 = vmatprep.mubr.f32.mxu0 0.0
        %768 = vmatmul.mubr.f32.gmra.mrb[0].mxu0 %v590
        %v769 = vpop.f32.mrb[0].mxu0
        %v770 = vadd.f32 %v627, %v769
        %v771 = vpop.f32.mrb[0].mxu0
        %772 = vmatprep.mubr.f32.mxu0 0.0
        %773 = vmatmul.mubr.f32.gmra.mrb[0].mxu0 %v591
        %v774 = vpop.f32.mrb[0].mxu0
        %v775 = vadd.f32 %v627, %v774
        %v776 = vpop.f32.mrb[0].mxu0
        %777 = vmatprep.mubr.f32.mxu0 0.0
        %778 = vmatmul.mubr.f32.gmra.mrb[0].mxu0 %v592
        %v779 = vpop.f32.mrb[0].mxu0
        %v780 = vadd.f32 %v627, %v779
        %v781 = vpop.f32.mrb[0].mxu0
        %782 = vmatprep.mubr.f32.mxu0 0.0
        %783 = vmatmul.mubr.f32.gmra.mrb[0].mxu0 %v593
        %v784 = vpop.f32.mrb[0].mxu0
        %v785 = vadd.f32 %v627, %v784
        %v786 = vpop.f32.mrb[0].mxu0
        %787 = vmatprep.mubr.f32.mxu0 0.0
        %788 = vmatmul.mubr.f32.gmra.mrb[0].mxu0 %v594
        %v789 = vpop.f32.mrb[0].mxu0
        %v790 = vadd.f32 %v627, %v789
        %v791 = vpop.f32.mrb[0].mxu0
        %792 = vmatprep.mubr.f32.mxu0 0.0
        %793 = vmatmul.mubr.f32.gmra.mrb[0].mxu0 %v595
        %v794 = vpop.f32.mrb[0].mxu0
        %v795 = vadd.f32 %v627, %v794
        %v796 = vpop.f32.mrb[0].mxu0
        %797 = vmatprep.mubr.f32.mxu0 0.0
        %798 = vmatmul.mubr.f32.gmra.mrb[0].mxu0 %v596
        %v799 = vpop.f32.mrb[0].mxu0
        %v800 = vadd.f32 %v627, %v799
        %v801 = vpop.f32.mrb[0].mxu0
        %802 = vmatprep.mubr.f32.mxu0 0.0
        %803 = vmatmul.mubr.f32.gmra.mrb[0].mxu0 %v597
        %v804 = vpop.f32.mrb[0].mxu0
        %v805 = vadd.f32 %v627, %v804
        %v806 = vpop.f32.mrb[0].mxu0
        %807 = vmatprep.mubr.f32.mxu0 0.0
        %808 = vmatmul.mubr.f32.gmra.mrb[0].mxu0 %v598
        %v809 = vpop.f32.mrb[0].mxu0
        %v810 = vadd.f32 %v627, %v809
        %v811 = vpop.f32.mrb[0].mxu0
        %812 = vmatprep.mubr.f32.mxu0 0.0
        %813 = vmatmul.mubr.f32.gmra.mrb[0].mxu0 %v599
        %v814 = vpop.f32.mrb[0].mxu0
        %v815 = vadd.f32 %v627, %v814
        %v816 = vpop.f32.mrb[0].mxu0
        %817 = vmatprep.mubr.f32.mxu0 0.0
        %818 = vmatmul.mubr.f32.gmra.mrb[0].mxu0 %v600
        %v819 = vpop.f32.mrb[0].mxu0
        %v820 = vadd.f32 %v627, %v819
        %v821 = vpop.f32.mrb[0].mxu0
        %822 = vmatprep.mubr.f32.mxu0 0.0
        %823 = vmatmul.mubr.f32.gmra.mrb[0].mxu0 %v601
        %v824 = vpop.f32.mrb[0].mxu0
        %v825 = vadd.f32 %v627, %v824
        %v826 = vpop.f32.mrb[0].mxu0
        %827 = vmatprep.mubr.f32.mxu0 0.0
        %828 = vmatmul.mubr.f32.gmra.mrb[0].mxu0 %v602
        %v829 = vpop.f32.mrb[0].mxu0
        %v830 = vadd.f32 %v627, %v829
        %v831 = vpop.f32.mrb[0].mxu0
        %832 = vmatprep.mubr.f32.mxu0 0.0
        %833 = vmatmul.mubr.f32.gmra.mrb[0].mxu0 %v603
        %v834 = vpop.f32.mrb[0].mxu0
        %v835 = vadd.f32 %v627, %v834
        %v836 = vpop.f32.mrb[0].mxu0
        %837 = vmatprep.mubr.f32.mxu0 0.0
        %838 = vmatmul.mubr.f32.gmra.mrb[0].mxu0 %v604
        %v839 = vpop.f32.mrb[0].mxu0
        %v840 = vadd.f32 %v627, %v839
        %v841 = vpop.f32.mrb[0].mxu0
        %842 = vmatprep.mubr.f32.mxu0 0.0
        %843 = vmatmul.mubr.f32.gmra.mrb[0].mxu0 %v605
        %v844 = vpop.f32.mrb[0].mxu0
        %v845 = vadd.f32 %v627, %v844
        %v846 = vpop.f32.mrb[0].mxu0
        %847 = vmatprep.mubr.f32.mxu0 0.0
        %848 = vmatmul.mubr.f32.gmra.mrb[0].mxu0 %v606
        %v849 = vpop.f32.mrb[0].mxu0
        %v850 = vadd.f32 %v627, %v849
        %v851 = vpop.f32.mrb[0].mxu0
        %852 = vdwg.mxu0
        %v853 = vmax.f32 %v695, 0.0
        %v854 = vmax.f32 %v700, 0.0
        %v855 = vmax.f32 %v705, 0.0
        %v856 = vmax.f32 %v710, 0.0
        %v857 = vmax.f32 %v715, 0.0
        %v858 = vmax.f32 %v720, 0.0
        %v859 = vmax.f32 %v725, 0.0
        %v860 = vmax.f32 %v730, 0.0
        %v861 = vmax.f32 %v735, 0.0
        %v862 = vmax.f32 %v740, 0.0
        %v863 = vmax.f32 %v745, 0.0
        %v864 = vmax.f32 %v750, 0.0
        %v865 = vmax.f32 %v755, 0.0
        %v866 = vmax.f32 %v760, 0.0
        %v867 = vmax.f32 %v765, 0.0
        %v868 = vmax.f32 %v770, 0.0
        %v869 = vmax.f32 %v775, 0.0
        %v870 = vmax.f32 %v780, 0.0
        %v871 = vmax.f32 %v785, 0.0
        %v872 = vmax.f32 %v790, 0.0
        %v873 = vmax.f32 %v795, 0.0
        %v874 = vmax.f32 %v800, 0.0
        %v875 = vmax.f32 %v805, 0.0
        %v876 = vmax.f32 %v810, 0.0
        %v877 = vmax.f32 %v815, 0.0
        %v878 = vmax.f32 %v820, 0.0
        %v879 = vmax.f32 %v825, 0.0
        %v880 = vmax.f32 %v830, 0.0
        %v881 = vmax.f32 %v835, 0.0
        %v882 = vmax.f32 %v840, 0.0
        %v883 = vmax.f32 %v845, 0.0
        %v884 = vmax.f32 %v850, 0.0
        %s885 = scalar_lea.vmem [#allocation2], 128
        %v886 = vld [vmem:[%s885] sm:$0xff]
        %v887 = vld [vmem:[%s885 + $0x8] sm:$0xff]
        %v888 = vld [vmem:[%s885 + $0x10] sm:$0xff]
        %v889 = vld [vmem:[%s885 + $0x18] sm:$0xff]
        %v890 = vld [vmem:[%s885 + $0x20] sm:$0xff]
        %v891 = vld [vmem:[%s885 + $0x28] sm:$0xff]
        %v892 = vld [vmem:[%s885 + $0x30] sm:$0xff]
        %v893 = vld [vmem:[%s885 + $0x38] sm:$0xff]
        %v894 = vld [vmem:[%s885 + $0x40] sm:$0xff]
        %v895 = vld [vmem:[%s885 + $0x48] sm:$0xff]
        %v896 = vld [vmem:[%s885 + $0x50] sm:$0xff]
        %v897 = vld [vmem:[%s885 + $0x58] sm:$0xff]
        %v898 = vld [vmem:[%s885 + $0x60] sm:$0xff]
        %v899 = vld [vmem:[%s885 + $0x68] sm:$0xff]
        %v900 = vld [vmem:[%s885 + $0x70] sm:$0xff]
        %v901 = vld [vmem:[%s885 + $0x78] sm:$0xff]
        %v902 = vld [vmem:[%s3 + $0x2] sm:$0x1]
        %v903 = vlaneseq
        %v904 = vshrl.u32 %v903, 7
        %v905 = vsub.s32 0, %v904
        %v906 = vrot.slane %v902, %v905
        %907 = vmatprep.subr.mxu0 0.0
        %908 = vmatpush1.msra.mxu0 %v886
        %909 = vmatprep.subr.mxu0 0.0
        %910 = vmatpush1.msra.mxu0 %v887
        %911 = vmatprep.subr.mxu0 0.0
        %912 = vmatpush1.msra.mxu0 %v888
        %913 = vmatprep.subr.mxu0 0.0
        %914 = vmatpush1.msra.mxu0 %v889
        %915 = vmatprep.subr.mxu0 0.0
        %916 = vmatpush1.msra.mxu0 %v890
        %917 = vmatprep.subr.mxu0 0.0
        %918 = vmatpush1.msra.mxu0 %v891
        %919 = vmatprep.subr.mxu0 0.0
        %920 = vmatpush1.msra.mxu0 %v892
        %921 = vmatprep.subr.mxu0 0.0
        %922 = vmatpush1.msra.mxu0 %v893
        %923 = vmatprep.subr.mxu0 0.0
        %924 = vmatpush1.msra.mxu0 %v894
        %925 = vmatprep.subr.mxu0 0.0
        %926 = vmatpush1.msra.mxu0 %v895
        %927 = vmatprep.subr.mxu0 0.0
        %928 = vmatpush1.msra.mxu0 %v896
        %929 = vmatprep.subr.mxu0 0.0
        %930 = vmatpush1.msra.mxu0 %v897
        %931 = vmatprep.subr.mxu0 0.0
        %932 = vmatpush1.msra.mxu0 %v898
        %933 = vmatprep.subr.mxu0 0.0
        %934 = vmatpush1.msra.mxu0 %v899
        %935 = vmatprep.subr.mxu0 0.0
        %936 = vmatpush1.msra.mxu0 %v900
        %937 = vmatprep.subr.mxu0 0.0
        %938 = vmatpush1.msra.mxu0 %v901
        %939 = vmatprep.subr.mxu0 0.0
        %940 = vmatpush1.msra.mxu0 0.0
        %941 = vmatprep.subr.mxu0 0.0
        %942 = vmatpush1.msra.mxu0 0.0
        %943 = vmatprep.subr.mxu0 0.0
        %944 = vmatpush1.msra.mxu0 0.0
        %945 = vmatprep.subr.mxu0 0.0
        %946 = vmatpush1.msra.mxu0 0.0
        %947 = vmatprep.subr.mxu0 0.0
        %948 = vmatpush1.msra.mxu0 0.0
        %949 = vmatprep.subr.mxu0 0.0
        %950 = vmatpush1.msra.mxu0 0.0
        %951 = vmatprep.subr.mxu0 0.0
        %952 = vmatpush1.msra.mxu0 0.0
        %953 = vmatprep.subr.mxu0 0.0
        %954 = vmatpush1.msra.mxu0 0.0
        %955 = vmatprep.subr.mxu0 0.0
        %956 = vmatpush1.msra.mxu0 0.0
        %957 = vmatprep.subr.mxu0 0.0
        %958 = vmatpush1.msra.mxu0 0.0
        %959 = vmatprep.subr.mxu0 0.0
        %960 = vmatpush1.msra.mxu0 0.0
        %961 = vmatprep.subr.mxu0 0.0
        %962 = vmatpush1.msra.mxu0 0.0
        %963 = vmatprep.subr.mxu0 0.0
        %964 = vmatpush1.msra.mxu0 0.0
        %965 = vmatprep.subr.mxu0 0.0
        %966 = vmatpush1.msra.mxu0 0.0
        %967 = vmatprep.subr.mxu0 0.0
        %968 = vmatpush1.msra.mxu0 0.0
        %969 = vmatprep.subr.mxu0 0.0
        %970 = vmatpush1.msra.mxu0 0.0
        %971 = vmatprep.mubr.f32.mxu0 0.0
        %972 = vmatmul.mubr.f32.gmra.mrb[0].mxu0 %v853
        %v973 = vpop.f32.mrb[0].mxu0
        %v974 = vadd.f32 %v906, %v973
        %v975 = vpop.f32.mrb[0].mxu0
        %976 = vmatprep.mubr.f32.mxu0 0.0
        %977 = vmatmul.mubr.f32.gmra.mrb[0].mxu0 %v854
        %v978 = vpop.f32.mrb[0].mxu0
        %v979 = vadd.f32 %v906, %v978
        %v980 = vpop.f32.mrb[0].mxu0
        %981 = vmatprep.mubr.f32.mxu0 0.0
        %982 = vmatmul.mubr.f32.gmra.mrb[0].mxu0 %v855
        %v983 = vpop.f32.mrb[0].mxu0
        %v984 = vadd.f32 %v906, %v983
        %v985 = vpop.f32.mrb[0].mxu0
        %986 = vmatprep.mubr.f32.mxu0 0.0
        %987 = vmatmul.mubr.f32.gmra.mrb[0].mxu0 %v856
        %v988 = vpop.f32.mrb[0].mxu0
        %v989 = vadd.f32 %v906, %v988
        %v990 = vpop.f32.mrb[0].mxu0
        %991 = vmatprep.mubr.f32.mxu0 0.0
        %992 = vmatmul.mubr.f32.gmra.mrb[0].mxu0 %v857
        %v993 = vpop.f32.mrb[0].mxu0
        %v994 = vadd.f32 %v906, %v993
        %v995 = vpop.f32.mrb[0].mxu0
        %996 = vmatprep.mubr.f32.mxu0 0.0
        %997 = vmatmul.mubr.f32.gmra.mrb[0].mxu0 %v858
        %v998 = vpop.f32.mrb[0].mxu0
        %v999 = vadd.f32 %v906, %v998
        %v1000 = vpop.f32.mrb[0].mxu0
        %1001 = vmatprep.mubr.f32.mxu0 0.0
        %1002 = vmatmul.mubr.f32.gmra.mrb[0].mxu0 %v859
        %v1003 = vpop.f32.mrb[0].mxu0
        %v1004 = vadd.f32 %v906, %v1003
        %v1005 = vpop.f32.mrb[0].mxu0
        %1006 = vmatprep.mubr.f32.mxu0 0.0
        %1007 = vmatmul.mubr.f32.gmra.mrb[0].mxu0 %v860
        %v1008 = vpop.f32.mrb[0].mxu0
        %v1009 = vadd.f32 %v906, %v1008
        %v1010 = vpop.f32.mrb[0].mxu0
        %1011 = vmatprep.mubr.f32.mxu0 0.0
        %1012 = vmatmul.mubr.f32.gmra.mrb[0].mxu0 %v861
        %v1013 = vpop.f32.mrb[0].mxu0
        %v1014 = vadd.f32 %v906, %v1013
        %v1015 = vpop.f32.mrb[0].mxu0
        %1016 = vmatprep.mubr.f32.mxu0 0.0
        %1017 = vmatmul.mubr.f32.gmra.mrb[0].mxu0 %v862
        %v1018 = vpop.f32.mrb[0].mxu0
        %v1019 = vadd.f32 %v906, %v1018
        %v1020 = vpop.f32.mrb[0].mxu0
        %1021 = vmatprep.mubr.f32.mxu0 0.0
        %1022 = vmatmul.mubr.f32.gmra.mrb[0].mxu0 %v863
        %v1023 = vpop.f32.mrb[0].mxu0
        %v1024 = vadd.f32 %v906, %v1023
        %v1025 = vpop.f32.mrb[0].mxu0
        %1026 = vmatprep.mubr.f32.mxu0 0.0
        %1027 = vmatmul.mubr.f32.gmra.mrb[0].mxu0 %v864
        %v1028 = vpop.f32.mrb[0].mxu0
        %v1029 = vadd.f32 %v906, %v1028
        %v1030 = vpop.f32.mrb[0].mxu0
        %1031 = vmatprep.mubr.f32.mxu0 0.0
        %1032 = vmatmul.mubr.f32.gmra.mrb[0].mxu0 %v865
        %v1033 = vpop.f32.mrb[0].mxu0
        %v1034 = vadd.f32 %v906, %v1033
        %v1035 = vpop.f32.mrb[0].mxu0
        %1036 = vmatprep.mubr.f32.mxu0 0.0
        %1037 = vmatmul.mubr.f32.gmra.mrb[0].mxu0 %v866
        %v1038 = vpop.f32.mrb[0].mxu0
        %v1039 = vadd.f32 %v906, %v1038
        %v1040 = vpop.f32.mrb[0].mxu0
        %1041 = vmatprep.mubr.f32.mxu0 0.0
        %1042 = vmatmul.mubr.f32.gmra.mrb[0].mxu0 %v867
        %v1043 = vpop.f32.mrb[0].mxu0
        %v1044 = vadd.f32 %v906, %v1043
        %v1045 = vpop.f32.mrb[0].mxu0
        %1046 = vmatprep.mubr.f32.mxu0 0.0
        %1047 = vmatmul.mubr.f32.gmra.mrb[0].mxu0 %v868
        %v1048 = vpop.f32.mrb[0].mxu0
        %v1049 = vadd.f32 %v906, %v1048
        %v1050 = vpop.f32.mrb[0].mxu0
        %1051 = vmatprep.mubr.f32.mxu0 0.0
        %1052 = vmatmul.mubr.f32.gmra.mrb[0].mxu0 %v869
        %v1053 = vpop.f32.mrb[0].mxu0
        %v1054 = vadd.f32 %v906, %v1053
        %v1055 = vpop.f32.mrb[0].mxu0
        %1056 = vmatprep.mubr.f32.mxu0 0.0
        %1057 = vmatmul.mubr.f32.gmra.mrb[0].mxu0 %v870
        %v1058 = vpop.f32.mrb[0].mxu0
        %v1059 = vadd.f32 %v906, %v1058
        %v1060 = vpop.f32.mrb[0].mxu0
        %1061 = vmatprep.mubr.f32.mxu0 0.0
        %1062 = vmatmul.mubr.f32.gmra.mrb[0].mxu0 %v871
        %v1063 = vpop.f32.mrb[0].mxu0
        %v1064 = vadd.f32 %v906, %v1063
        %v1065 = vpop.f32.mrb[0].mxu0
        %1066 = vmatprep.mubr.f32.mxu0 0.0
        %1067 = vmatmul.mubr.f32.gmra.mrb[0].mxu0 %v872
        %v1068 = vpop.f32.mrb[0].mxu0
        %v1069 = vadd.f32 %v906, %v1068
        %v1070 = vpop.f32.mrb[0].mxu0
        %1071 = vmatprep.mubr.f32.mxu0 0.0
        %1072 = vmatmul.mubr.f32.gmra.mrb[0].mxu0 %v873
        %v1073 = vpop.f32.mrb[0].mxu0
        %v1074 = vadd.f32 %v906, %v1073
        %v1075 = vpop.f32.mrb[0].mxu0
        %1076 = vmatprep.mubr.f32.mxu0 0.0
        %1077 = vmatmul.mubr.f32.gmra.mrb[0].mxu0 %v874
        %v1078 = vpop.f32.mrb[0].mxu0
        %v1079 = vadd.f32 %v906, %v1078
        %v1080 = vpop.f32.mrb[0].mxu0
        %1081 = vmatprep.mubr.f32.mxu0 0.0
        %1082 = vmatmul.mubr.f32.gmra.mrb[0].mxu0 %v875
        %v1083 = vpop.f32.mrb[0].mxu0
        %v1084 = vadd.f32 %v906, %v1083
        %v1085 = vpop.f32.mrb[0].mxu0
        %1086 = vmatprep.mubr.f32.mxu0 0.0
        %1087 = vmatmul.mubr.f32.gmra.mrb[0].mxu0 %v876
        %v1088 = vpop.f32.mrb[0].mxu0
        %v1089 = vadd.f32 %v906, %v1088
        %v1090 = vpop.f32.mrb[0].mxu0
        %1091 = vmatprep.mubr.f32.mxu0 0.0
        %1092 = vmatmul.mubr.f32.gmra.mrb[0].mxu0 %v877
        %v1093 = vpop.f32.mrb[0].mxu0
        %v1094 = vadd.f32 %v906, %v1093
        %v1095 = vpop.f32.mrb[0].mxu0
        %1096 = vmatprep.mubr.f32.mxu0 0.0
        %1097 = vmatmul.mubr.f32.gmra.mrb[0].mxu0 %v878
        %v1098 = vpop.f32.mrb[0].mxu0
        %v1099 = vadd.f32 %v906, %v1098
        %v1100 = vpop.f32.mrb[0].mxu0
        %1101 = vmatprep.mubr.f32.mxu0 0.0
        %1102 = vmatmul.mubr.f32.gmra.mrb[0].mxu0 %v879
        %v1103 = vpop.f32.mrb[0].mxu0
        %v1104 = vadd.f32 %v906, %v1103
        %v1105 = vpop.f32.mrb[0].mxu0
        %1106 = vmatprep.mubr.f32.mxu0 0.0
        %1107 = vmatmul.mubr.f32.gmra.mrb[0].mxu0 %v880
        %v1108 = vpop.f32.mrb[0].mxu0
        %v1109 = vadd.f32 %v906, %v1108
        %v1110 = vpop.f32.mrb[0].mxu0
        %1111 = vmatprep.mubr.f32.mxu0 0.0
        %1112 = vmatmul.mubr.f32.gmra.mrb[0].mxu0 %v881
        %v1113 = vpop.f32.mrb[0].mxu0
        %v1114 = vadd.f32 %v906, %v1113
        %v1115 = vpop.f32.mrb[0].mxu0
        %1116 = vmatprep.mubr.f32.mxu0 0.0
        %1117 = vmatmul.mubr.f32.gmra.mrb[0].mxu0 %v882
        %v1118 = vpop.f32.mrb[0].mxu0
        %v1119 = vadd.f32 %v906, %v1118
        %v1120 = vpop.f32.mrb[0].mxu0
        %1121 = vmatprep.mubr.f32.mxu0 0.0
        %1122 = vmatmul.mubr.f32.gmra.mrb[0].mxu0 %v883
        %v1123 = vpop.f32.mrb[0].mxu0
        %v1124 = vadd.f32 %v906, %v1123
        %v1125 = vpop.f32.mrb[0].mxu0
        %1126 = vmatprep.mubr.f32.mxu0 0.0
        %1127 = vmatmul.mubr.f32.gmra.mrb[0].mxu0 %v884
        %v1128 = vpop.f32.mrb[0].mxu0
        %v1129 = vadd.f32 %v906, %v1128
        %v1130 = vpop.f32.mrb[0].mxu0
        %1131 = vdwg.mxu0
        %v1132 = vmax.f32 %v974, 0.0
        %v1133 = vmax.f32 %v979, 0.0
        %v1134 = vmax.f32 %v984, 0.0
        %v1135 = vmax.f32 %v989, 0.0
        %v1136 = vmax.f32 %v994, 0.0
        %v1137 = vmax.f32 %v999, 0.0
        %v1138 = vmax.f32 %v1004, 0.0
        %v1139 = vmax.f32 %v1009, 0.0
        %v1140 = vmax.f32 %v1014, 0.0
        %v1141 = vmax.f32 %v1019, 0.0
        %v1142 = vmax.f32 %v1024, 0.0
        %v1143 = vmax.f32 %v1029, 0.0
        %v1144 = vmax.f32 %v1034, 0.0
        %v1145 = vmax.f32 %v1039, 0.0
        %v1146 = vmax.f32 %v1044, 0.0
        %v1147 = vmax.f32 %v1049, 0.0
        %v1148 = vmax.f32 %v1054, 0.0
        %v1149 = vmax.f32 %v1059, 0.0
        %v1150 = vmax.f32 %v1064, 0.0
        %v1151 = vmax.f32 %v1069, 0.0
        %v1152 = vmax.f32 %v1074, 0.0
        %v1153 = vmax.f32 %v1079, 0.0
        %v1154 = vmax.f32 %v1084, 0.0
        %v1155 = vmax.f32 %v1089, 0.0
        %v1156 = vmax.f32 %v1094, 0.0
        %v1157 = vmax.f32 %v1099, 0.0
        %v1158 = vmax.f32 %v1104, 0.0
        %v1159 = vmax.f32 %v1109, 0.0
        %v1160 = vmax.f32 %v1114, 0.0
        %v1161 = vmax.f32 %v1119, 0.0
        %v1162 = vmax.f32 %v1124, 0.0
        %v1163 = vmax.f32 %v1129, 0.0
        %s1164 = scalar_lea.vmem [#allocation2], 256
        %v1165 = vld [vmem:[%s1164] sm:$0xff]
        %v1166 = vld [vmem:[%s1164 + $0x8] sm:$0xff]
        %v1167 = vld [vmem:[%s1164 + $0x10] sm:$0xff]
        %v1168 = vld [vmem:[%s1164 + $0x18] sm:$0xff]
        %v1169 = vld [vmem:[%s1164 + $0x20] sm:$0xff]
        %v1170 = vld [vmem:[%s1164 + $0x28] sm:$0xff]
        %v1171 = vld [vmem:[%s1164 + $0x30] sm:$0xff]
        %v1172 = vld [vmem:[%s1164 + $0x38] sm:$0xff]
        %v1173 = vld [vmem:[%s1164 + $0x40] sm:$0xff]
        %v1174 = vld [vmem:[%s1164 + $0x48] sm:$0xff]
        %v1175 = vld [vmem:[%s1164 + $0x50] sm:$0xff]
        %v1176 = vld [vmem:[%s1164 + $0x58] sm:$0xff]
        %v1177 = vld [vmem:[%s1164 + $0x60] sm:$0xff]
        %v1178 = vld [vmem:[%s1164 + $0x68] sm:$0xff]
        %v1179 = vld [vmem:[%s1164 + $0x70] sm:$0xff]
        %v1180 = vld [vmem:[%s1164 + $0x78] sm:$0xff]
        %v1181 = vld [vmem:[%s3 + $0x3] sm:$0x1]
        %v1182 = vlaneseq
        %v1183 = vshrl.u32 %v1182, 7
        %v1184 = vsub.s32 0, %v1183
        %v1185 = vrot.slane %v1181, %v1184
        %1186 = vmatprep.subr.mxu0 0.0
        %1187 = vmatpush1.msra.mxu0 %v1165
        %1188 = vmatprep.subr.mxu0 0.0
        %1189 = vmatpush1.msra.mxu0 %v1166
        %1190 = vmatprep.subr.mxu0 0.0
        %1191 = vmatpush1.msra.mxu0 %v1167
        %1192 = vmatprep.subr.mxu0 0.0
        %1193 = vmatpush1.msra.mxu0 %v1168
        %1194 = vmatprep.subr.mxu0 0.0
        %1195 = vmatpush1.msra.mxu0 %v1169
        %1196 = vmatprep.subr.mxu0 0.0
        %1197 = vmatpush1.msra.mxu0 %v1170
        %1198 = vmatprep.subr.mxu0 0.0
        %1199 = vmatpush1.msra.mxu0 %v1171
        %1200 = vmatprep.subr.mxu0 0.0
        %1201 = vmatpush1.msra.mxu0 %v1172
        %1202 = vmatprep.subr.mxu0 0.0
        %1203 = vmatpush1.msra.mxu0 %v1173
        %1204 = vmatprep.subr.mxu0 0.0
        %1205 = vmatpush1.msra.mxu0 %v1174
        %1206 = vmatprep.subr.mxu0 0.0
        %1207 = vmatpush1.msra.mxu0 %v1175
        %1208 = vmatprep.subr.mxu0 0.0
        %1209 = vmatpush1.msra.mxu0 %v1176
        %1210 = vmatprep.subr.mxu0 0.0
        %1211 = vmatpush1.msra.mxu0 %v1177
        %1212 = vmatprep.subr.mxu0 0.0
        %1213 = vmatpush1.msra.mxu0 %v1178
        %1214 = vmatprep.subr.mxu0 0.0
        %1215 = vmatpush1.msra.mxu0 %v1179
        %1216 = vmatprep.subr.mxu0 0.0
        %1217 = vmatpush1.msra.mxu0 %v1180
        %1218 = vmatprep.subr.mxu0 0.0
        %1219 = vmatpush1.msra.mxu0 0.0
        %1220 = vmatprep.subr.mxu0 0.0
        %1221 = vmatpush1.msra.mxu0 0.0
        %1222 = vmatprep.subr.mxu0 0.0
        %1223 = vmatpush1.msra.mxu0 0.0
        %1224 = vmatprep.subr.mxu0 0.0
        %1225 = vmatpush1.msra.mxu0 0.0
        %1226 = vmatprep.subr.mxu0 0.0
        %1227 = vmatpush1.msra.mxu0 0.0
        %1228 = vmatprep.subr.mxu0 0.0
        %1229 = vmatpush1.msra.mxu0 0.0
        %1230 = vmatprep.subr.mxu0 0.0
        %1231 = vmatpush1.msra.mxu0 0.0
        %1232 = vmatprep.subr.mxu0 0.0
        %1233 = vmatpush1.msra.mxu0 0.0
        %1234 = vmatprep.subr.mxu0 0.0
        %1235 = vmatpush1.msra.mxu0 0.0
        %1236 = vmatprep.subr.mxu0 0.0
        %1237 = vmatpush1.msra.mxu0 0.0
        %1238 = vmatprep.subr.mxu0 0.0
        %1239 = vmatpush1.msra.mxu0 0.0
        %1240 = vmatprep.subr.mxu0 0.0
        %1241 = vmatpush1.msra.mxu0 0.0
        %1242 = vmatprep.subr.mxu0 0.0
        %1243 = vmatpush1.msra.mxu0 0.0
        %1244 = vmatprep.subr.mxu0 0.0
        %1245 = vmatpush1.msra.mxu0 0.0
        %1246 = vmatprep.subr.mxu0 0.0
        %1247 = vmatpush1.msra.mxu0 0.0
        %1248 = vmatprep.subr.mxu0 0.0
        %1249 = vmatpush1.msra.mxu0 0.0
        %1250 = vmatprep.mubr.f32.mxu0 0.0
        %1251 = vmatmul.mubr.f32.gmra.mrb[0].mxu0 %v1132
        %v1252 = vpop.f32.mrb[0].mxu0
        %v1253 = vadd.f32 %v1185, %v1252
        %v1254 = vpop.f32.mrb[0].mxu0
        %1255 = vmatprep.mubr.f32.mxu0 0.0
        %1256 = vmatmul.mubr.f32.gmra.mrb[0].mxu0 %v1133
        %v1257 = vpop.f32.mrb[0].mxu0
        %v1258 = vadd.f32 %v1185, %v1257
        %v1259 = vpop.f32.mrb[0].mxu0
        %1260 = vmatprep.mubr.f32.mxu0 0.0
        %1261 = vmatmul.mubr.f32.gmra.mrb[0].mxu0 %v1134
        %v1262 = vpop.f32.mrb[0].mxu0
        %v1263 = vadd.f32 %v1185, %v1262
        %v1264 = vpop.f32.mrb[0].mxu0
        %1265 = vmatprep.mubr.f32.mxu0 0.0
        %1266 = vmatmul.mubr.f32.gmra.mrb[0].mxu0 %v1135
        %v1267 = vpop.f32.mrb[0].mxu0
        %v1268 = vadd.f32 %v1185, %v1267
        %v1269 = vpop.f32.mrb[0].mxu0
        %1270 = vmatprep.mubr.f32.mxu0 0.0
        %1271 = vmatmul.mubr.f32.gmra.mrb[0].mxu0 %v1136
        %v1272 = vpop.f32.mrb[0].mxu0
        %v1273 = vadd.f32 %v1185, %v1272
        %v1274 = vpop.f32.mrb[0].mxu0
        %1275 = vmatprep.mubr.f32.mxu0 0.0
        %1276 = vmatmul.mubr.f32.gmra.mrb[0].mxu0 %v1137
        %v1277 = vpop.f32.mrb[0].mxu0
        %v1278 = vadd.f32 %v1185, %v1277
        %v1279 = vpop.f32.mrb[0].mxu0
        %1280 = vmatprep.mubr.f32.mxu0 0.0
        %1281 = vmatmul.mubr.f32.gmra.mrb[0].mxu0 %v1138
        %v1282 = vpop.f32.mrb[0].mxu0
        %v1283 = vadd.f32 %v1185, %v1282
        %v1284 = vpop.f32.mrb[0].mxu0
        %1285 = vmatprep.mubr.f32.mxu0 0.0
        %1286 = vmatmul.mubr.f32.gmra.mrb[0].mxu0 %v1139
        %v1287 = vpop.f32.mrb[0].mxu0
        %v1288 = vadd.f32 %v1185, %v1287
        %v1289 = vpop.f32.mrb[0].mxu0
        %1290 = vmatprep.mubr.f32.mxu0 0.0
        %1291 = vmatmul.mubr.f32.gmra.mrb[0].mxu0 %v1140
        %v1292 = vpop.f32.mrb[0].mxu0
        %v1293 = vadd.f32 %v1185, %v1292
        %v1294 = vpop.f32.mrb[0].mxu0
        %1295 = vmatprep.mubr.f32.mxu0 0.0
        %1296 = vmatmul.mubr.f32.gmra.mrb[0].mxu0 %v1141
        %v1297 = vpop.f32.mrb[0].mxu0
        %v1298 = vadd.f32 %v1185, %v1297
        %v1299 = vpop.f32.mrb[0].mxu0
        %1300 = vmatprep.mubr.f32.mxu0 0.0
        %1301 = vmatmul.mubr.f32.gmra.mrb[0].mxu0 %v1142
        %v1302 = vpop.f32.mrb[0].mxu0
        %v1303 = vadd.f32 %v1185, %v1302
        %v1304 = vpop.f32.mrb[0].mxu0
        %1305 = vmatprep.mubr.f32.mxu0 0.0
        %1306 = vmatmul.mubr.f32.gmra.mrb[0].mxu0 %v1143
        %v1307 = vpop.f32.mrb[0].mxu0
        %v1308 = vadd.f32 %v1185, %v1307
        %v1309 = vpop.f32.mrb[0].mxu0
        %1310 = vmatprep.mubr.f32.mxu0 0.0
        %1311 = vmatmul.mubr.f32.gmra.mrb[0].mxu0 %v1144
        %v1312 = vpop.f32.mrb[0].mxu0
        %v1313 = vadd.f32 %v1185, %v1312
        %v1314 = vpop.f32.mrb[0].mxu0
        %1315 = vmatprep.mubr.f32.mxu0 0.0
        %1316 = vmatmul.mubr.f32.gmra.mrb[0].mxu0 %v1145
        %v1317 = vpop.f32.mrb[0].mxu0
        %v1318 = vadd.f32 %v1185, %v1317
        %v1319 = vpop.f32.mrb[0].mxu0
        %1320 = vmatprep.mubr.f32.mxu0 0.0
        %1321 = vmatmul.mubr.f32.gmra.mrb[0].mxu0 %v1146
        %v1322 = vpop.f32.mrb[0].mxu0
        %v1323 = vadd.f32 %v1185, %v1322
        %v1324 = vpop.f32.mrb[0].mxu0
        %1325 = vmatprep.mubr.f32.mxu0 0.0
        %1326 = vmatmul.mubr.f32.gmra.mrb[0].mxu0 %v1147
        %v1327 = vpop.f32.mrb[0].mxu0
        %v1328 = vadd.f32 %v1185, %v1327
        %v1329 = vpop.f32.mrb[0].mxu0
        %1330 = vmatprep.mubr.f32.mxu0 0.0
        %1331 = vmatmul.mubr.f32.gmra.mrb[0].mxu0 %v1148
        %v1332 = vpop.f32.mrb[0].mxu0
        %v1333 = vadd.f32 %v1185, %v1332
        %v1334 = vpop.f32.mrb[0].mxu0
        %1335 = vmatprep.mubr.f32.mxu0 0.0
        %1336 = vmatmul.mubr.f32.gmra.mrb[0].mxu0 %v1149
        %v1337 = vpop.f32.mrb[0].mxu0
        %v1338 = vadd.f32 %v1185, %v1337
        %v1339 = vpop.f32.mrb[0].mxu0
        %1340 = vmatprep.mubr.f32.mxu0 0.0
        %1341 = vmatmul.mubr.f32.gmra.mrb[0].mxu0 %v1150
        %v1342 = vpop.f32.mrb[0].mxu0
        %v1343 = vadd.f32 %v1185, %v1342
        %v1344 = vpop.f32.mrb[0].mxu0
        %1345 = vmatprep.mubr.f32.mxu0 0.0
        %1346 = vmatmul.mubr.f32.gmra.mrb[0].mxu0 %v1151
        %v1347 = vpop.f32.mrb[0].mxu0
        %v1348 = vadd.f32 %v1185, %v1347
        %v1349 = vpop.f32.mrb[0].mxu0
        %1350 = vmatprep.mubr.f32.mxu0 0.0
        %1351 = vmatmul.mubr.f32.gmra.mrb[0].mxu0 %v1152
        %v1352 = vpop.f32.mrb[0].mxu0
        %v1353 = vadd.f32 %v1185, %v1352
        %v1354 = vpop.f32.mrb[0].mxu0
        %1355 = vmatprep.mubr.f32.mxu0 0.0
        %1356 = vmatmul.mubr.f32.gmra.mrb[0].mxu0 %v1153
        %v1357 = vpop.f32.mrb[0].mxu0
        %v1358 = vadd.f32 %v1185, %v1357
        %v1359 = vpop.f32.mrb[0].mxu0
        %1360 = vmatprep.mubr.f32.mxu0 0.0
        %1361 = vmatmul.mubr.f32.gmra.mrb[0].mxu0 %v1154
        %v1362 = vpop.f32.mrb[0].mxu0
        %v1363 = vadd.f32 %v1185, %v1362
        %v1364 = vpop.f32.mrb[0].mxu0
        %1365 = vmatprep.mubr.f32.mxu0 0.0
        %1366 = vmatmul.mubr.f32.gmra.mrb[0].mxu0 %v1155
        %v1367 = vpop.f32.mrb[0].mxu0
        %v1368 = vadd.f32 %v1185, %v1367
        %v1369 = vpop.f32.mrb[0].mxu0
        %1370 = vmatprep.mubr.f32.mxu0 0.0
        %1371 = vmatmul.mubr.f32.gmra.mrb[0].mxu0 %v1156
        %v1372 = vpop.f32.mrb[0].mxu0
        %v1373 = vadd.f32 %v1185, %v1372
        %v1374 = vpop.f32.mrb[0].mxu0
        %1375 = vmatprep.mubr.f32.mxu0 0.0
        %1376 = vmatmul.mubr.f32.gmra.mrb[0].mxu0 %v1157
        %v1377 = vpop.f32.mrb[0].mxu0
        %v1378 = vadd.f32 %v1185, %v1377
        %v1379 = vpop.f32.mrb[0].mxu0
        %1380 = vmatprep.mubr.f32.mxu0 0.0
        %1381 = vmatmul.mubr.f32.gmra.mrb[0].mxu0 %v1158
        %v1382 = vpop.f32.mrb[0].mxu0
        %v1383 = vadd.f32 %v1185, %v1382
        %v1384 = vpop.f32.mrb[0].mxu0
        %1385 = vmatprep.mubr.f32.mxu0 0.0
        %1386 = vmatmul.mubr.f32.gmra.mrb[0].mxu0 %v1159
        %v1387 = vpop.f32.mrb[0].mxu0
        %v1388 = vadd.f32 %v1185, %v1387
        %v1389 = vpop.f32.mrb[0].mxu0
        %1390 = vmatprep.mubr.f32.mxu0 0.0
        %1391 = vmatmul.mubr.f32.gmra.mrb[0].mxu0 %v1160
        %v1392 = vpop.f32.mrb[0].mxu0
        %v1393 = vadd.f32 %v1185, %v1392
        %v1394 = vpop.f32.mrb[0].mxu0
        %1395 = vmatprep.mubr.f32.mxu0 0.0
        %1396 = vmatmul.mubr.f32.gmra.mrb[0].mxu0 %v1161
        %v1397 = vpop.f32.mrb[0].mxu0
        %v1398 = vadd.f32 %v1185, %v1397
        %v1399 = vpop.f32.mrb[0].mxu0
        %1400 = vmatprep.mubr.f32.mxu0 0.0
        %1401 = vmatmul.mubr.f32.gmra.mrb[0].mxu0 %v1162
        %v1402 = vpop.f32.mrb[0].mxu0
        %v1403 = vadd.f32 %v1185, %v1402
        %v1404 = vpop.f32.mrb[0].mxu0
        %1405 = vmatprep.mubr.f32.mxu0 0.0
        %1406 = vmatmul.mubr.f32.gmra.mrb[0].mxu0 %v1163
        %v1407 = vpop.f32.mrb[0].mxu0
        %v1408 = vadd.f32 %v1185, %v1407
        %v1409 = vpop.f32.mrb[0].mxu0
        %1410 = vdwg.mxu0
        %v1411 = vmax.f32 %v1253, 0.0
        %v1412 = vmax.f32 %v1258, 0.0
        %v1413 = vmax.f32 %v1263, 0.0
        %v1414 = vmax.f32 %v1268, 0.0
        %v1415 = vmax.f32 %v1273, 0.0
        %v1416 = vmax.f32 %v1278, 0.0
        %v1417 = vmax.f32 %v1283, 0.0
        %v1418 = vmax.f32 %v1288, 0.0
        %v1419 = vmax.f32 %v1293, 0.0
        %v1420 = vmax.f32 %v1298, 0.0
        %v1421 = vmax.f32 %v1303, 0.0
        %v1422 = vmax.f32 %v1308, 0.0
        %v1423 = vmax.f32 %v1313, 0.0
        %v1424 = vmax.f32 %v1318, 0.0
        %v1425 = vmax.f32 %v1323, 0.0
        %v1426 = vmax.f32 %v1328, 0.0
        %v1427 = vmax.f32 %v1333, 0.0
        %v1428 = vmax.f32 %v1338, 0.0
        %v1429 = vmax.f32 %v1343, 0.0
        %v1430 = vmax.f32 %v1348, 0.0
        %v1431 = vmax.f32 %v1353, 0.0
        %v1432 = vmax.f32 %v1358, 0.0
        %v1433 = vmax.f32 %v1363, 0.0
        %v1434 = vmax.f32 %v1368, 0.0
        %v1435 = vmax.f32 %v1373, 0.0
        %v1436 = vmax.f32 %v1378, 0.0
        %v1437 = vmax.f32 %v1383, 0.0
        %v1438 = vmax.f32 %v1388, 0.0
        %v1439 = vmax.f32 %v1393, 0.0
        %v1440 = vmax.f32 %v1398, 0.0
        %v1441 = vmax.f32 %v1403, 0.0
        %v1442 = vmax.f32 %v1408, 0.0
        %s1443 = scalar_lea.vmem [#allocation2], 384
        %v1444 = vld [vmem:[%s1443] sm:$0xff]
        %v1445 = vld [vmem:[%s1443 + $0x8] sm:$0xff]
        %v1446 = vld [vmem:[%s1443 + $0x10] sm:$0xff]
        %v1447 = vld [vmem:[%s1443 + $0x18] sm:$0xff]
        %v1448 = vld [vmem:[%s1443 + $0x20] sm:$0xff]
        %v1449 = vld [vmem:[%s1443 + $0x28] sm:$0xff]
        %v1450 = vld [vmem:[%s1443 + $0x30] sm:$0xff]
        %v1451 = vld [vmem:[%s1443 + $0x38] sm:$0xff]
        %v1452 = vld [vmem:[%s1443 + $0x40] sm:$0xff]
        %v1453 = vld [vmem:[%s1443 + $0x48] sm:$0xff]
        %v1454 = vld [vmem:[%s1443 + $0x50] sm:$0xff]
        %v1455 = vld [vmem:[%s1443 + $0x58] sm:$0xff]
        %v1456 = vld [vmem:[%s1443 + $0x60] sm:$0xff]
        %v1457 = vld [vmem:[%s1443 + $0x68] sm:$0xff]
        %v1458 = vld [vmem:[%s1443 + $0x70] sm:$0xff]
        %v1459 = vld [vmem:[%s1443 + $0x78] sm:$0xff]
        %v1460 = vld [vmem:[%s3 + $0x4] sm:$0x1]
        %v1461 = vlaneseq
        %v1462 = vshrl.u32 %v1461, 7
        %v1463 = vsub.s32 0, %v1462
        %v1464 = vrot.slane %v1460, %v1463
        %1465 = vmatprep.subr.mxu0 0.0
        %1466 = vmatpush1.msra.mxu0 %v1444
        %1467 = vmatprep.subr.mxu0 0.0
        %1468 = vmatpush1.msra.mxu0 %v1445
        %1469 = vmatprep.subr.mxu0 0.0
        %1470 = vmatpush1.msra.mxu0 %v1446
        %1471 = vmatprep.subr.mxu0 0.0
        %1472 = vmatpush1.msra.mxu0 %v1447
        %1473 = vmatprep.subr.mxu0 0.0
        %1474 = vmatpush1.msra.mxu0 %v1448
        %1475 = vmatprep.subr.mxu0 0.0
        %1476 = vmatpush1.msra.mxu0 %v1449
        %1477 = vmatprep.subr.mxu0 0.0
        %1478 = vmatpush1.msra.mxu0 %v1450
        %1479 = vmatprep.subr.mxu0 0.0
        %1480 = vmatpush1.msra.mxu0 %v1451
        %1481 = vmatprep.subr.mxu0 0.0
        %1482 = vmatpush1.msra.mxu0 %v1452
        %1483 = vmatprep.subr.mxu0 0.0
        %1484 = vmatpush1.msra.mxu0 %v1453
        %1485 = vmatprep.subr.mxu0 0.0
        %1486 = vmatpush1.msra.mxu0 %v1454
        %1487 = vmatprep.subr.mxu0 0.0
        %1488 = vmatpush1.msra.mxu0 %v1455
        %1489 = vmatprep.subr.mxu0 0.0
        %1490 = vmatpush1.msra.mxu0 %v1456
        %1491 = vmatprep.subr.mxu0 0.0
        %1492 = vmatpush1.msra.mxu0 %v1457
        %1493 = vmatprep.subr.mxu0 0.0
        %1494 = vmatpush1.msra.mxu0 %v1458
        %1495 = vmatprep.subr.mxu0 0.0
        %1496 = vmatpush1.msra.mxu0 %v1459
        %1497 = vmatprep.subr.mxu0 0.0
        %1498 = vmatpush1.msra.mxu0 0.0
        %1499 = vmatprep.subr.mxu0 0.0
        %1500 = vmatpush1.msra.mxu0 0.0
        %1501 = vmatprep.subr.mxu0 0.0
        %1502 = vmatpush1.msra.mxu0 0.0
        %1503 = vmatprep.subr.mxu0 0.0
        %1504 = vmatpush1.msra.mxu0 0.0
        %1505 = vmatprep.subr.mxu0 0.0
        %1506 = vmatpush1.msra.mxu0 0.0
        %1507 = vmatprep.subr.mxu0 0.0
        %1508 = vmatpush1.msra.mxu0 0.0
        %1509 = vmatprep.subr.mxu0 0.0
        %1510 = vmatpush1.msra.mxu0 0.0
        %1511 = vmatprep.subr.mxu0 0.0
        %1512 = vmatpush1.msra.mxu0 0.0
        %1513 = vmatprep.subr.mxu0 0.0
        %1514 = vmatpush1.msra.mxu0 0.0
        %1515 = vmatprep.subr.mxu0 0.0
        %1516 = vmatpush1.msra.mxu0 0.0
        %1517 = vmatprep.subr.mxu0 0.0
        %1518 = vmatpush1.msra.mxu0 0.0
        %1519 = vmatprep.subr.mxu0 0.0
        %1520 = vmatpush1.msra.mxu0 0.0
        %1521 = vmatprep.subr.mxu0 0.0
        %1522 = vmatpush1.msra.mxu0 0.0
        %1523 = vmatprep.subr.mxu0 0.0
        %1524 = vmatpush1.msra.mxu0 0.0
        %1525 = vmatprep.subr.mxu0 0.0
        %1526 = vmatpush1.msra.mxu0 0.0
        %1527 = vmatprep.subr.mxu0 0.0
        %1528 = vmatpush1.msra.mxu0 0.0
        %1529 = vmatprep.mubr.f32.mxu0 0.0
        %1530 = vmatmul.mubr.f32.gmra.mrb[0].mxu0 %v1411
        %v1531 = vpop.f32.mrb[0].mxu0
        %v1532 = vadd.f32 %v1464, %v1531
        %v1533 = vpop.f32.mrb[0].mxu0
        %1534 = vmatprep.mubr.f32.mxu0 0.0
        %1535 = vmatmul.mubr.f32.gmra.mrb[0].mxu0 %v1412
        %v1536 = vpop.f32.mrb[0].mxu0
        %v1537 = vadd.f32 %v1464, %v1536
        %v1538 = vpop.f32.mrb[0].mxu0
        %1539 = vmatprep.mubr.f32.mxu0 0.0
        %1540 = vmatmul.mubr.f32.gmra.mrb[0].mxu0 %v1413
        %v1541 = vpop.f32.mrb[0].mxu0
        %v1542 = vadd.f32 %v1464, %v1541
        %v1543 = vpop.f32.mrb[0].mxu0
        %1544 = vmatprep.mubr.f32.mxu0 0.0
        %1545 = vmatmul.mubr.f32.gmra.mrb[0].mxu0 %v1414
        %v1546 = vpop.f32.mrb[0].mxu0
        %v1547 = vadd.f32 %v1464, %v1546
        %v1548 = vpop.f32.mrb[0].mxu0
        %1549 = vmatprep.mubr.f32.mxu0 0.0
        %1550 = vmatmul.mubr.f32.gmra.mrb[0].mxu0 %v1415
        %v1551 = vpop.f32.mrb[0].mxu0
        %v1552 = vadd.f32 %v1464, %v1551
        %v1553 = vpop.f32.mrb[0].mxu0
        %1554 = vmatprep.mubr.f32.mxu0 0.0
        %1555 = vmatmul.mubr.f32.gmra.mrb[0].mxu0 %v1416
        %v1556 = vpop.f32.mrb[0].mxu0
        %v1557 = vadd.f32 %v1464, %v1556
        %v1558 = vpop.f32.mrb[0].mxu0
        %1559 = vmatprep.mubr.f32.mxu0 0.0
        %1560 = vmatmul.mubr.f32.gmra.mrb[0].mxu0 %v1417
        %v1561 = vpop.f32.mrb[0].mxu0
        %v1562 = vadd.f32 %v1464, %v1561
        %v1563 = vpop.f32.mrb[0].mxu0
        %1564 = vmatprep.mubr.f32.mxu0 0.0
        %1565 = vmatmul.mubr.f32.gmra.mrb[0].mxu0 %v1418
        %v1566 = vpop.f32.mrb[0].mxu0
        %v1567 = vadd.f32 %v1464, %v1566
        %v1568 = vpop.f32.mrb[0].mxu0
        %1569 = vmatprep.mubr.f32.mxu0 0.0
        %1570 = vmatmul.mubr.f32.gmra.mrb[0].mxu0 %v1419
        %v1571 = vpop.f32.mrb[0].mxu0
        %v1572 = vadd.f32 %v1464, %v1571
        %v1573 = vpop.f32.mrb[0].mxu0
        %1574 = vmatprep.mubr.f32.mxu0 0.0
        %1575 = vmatmul.mubr.f32.gmra.mrb[0].mxu0 %v1420
        %v1576 = vpop.f32.mrb[0].mxu0
        %v1577 = vadd.f32 %v1464, %v1576
        %v1578 = vpop.f32.mrb[0].mxu0
        %1579 = vmatprep.mubr.f32.mxu0 0.0
        %1580 = vmatmul.mubr.f32.gmra.mrb[0].mxu0 %v1421
        %v1581 = vpop.f32.mrb[0].mxu0
        %v1582 = vadd.f32 %v1464, %v1581
        %v1583 = vpop.f32.mrb[0].mxu0
        %1584 = vmatprep.mubr.f32.mxu0 0.0
        %1585 = vmatmul.mubr.f32.gmra.mrb[0].mxu0 %v1422
        %v1586 = vpop.f32.mrb[0].mxu0
        %v1587 = vadd.f32 %v1464, %v1586
        %v1588 = vpop.f32.mrb[0].mxu0
        %1589 = vmatprep.mubr.f32.mxu0 0.0
        %1590 = vmatmul.mubr.f32.gmra.mrb[0].mxu0 %v1423
        %v1591 = vpop.f32.mrb[0].mxu0
        %v1592 = vadd.f32 %v1464, %v1591
        %v1593 = vpop.f32.mrb[0].mxu0
        %1594 = vmatprep.mubr.f32.mxu0 0.0
        %1595 = vmatmul.mubr.f32.gmra.mrb[0].mxu0 %v1424
        %v1596 = vpop.f32.mrb[0].mxu0
        %v1597 = vadd.f32 %v1464, %v1596
        %v1598 = vpop.f32.mrb[0].mxu0
        %1599 = vmatprep.mubr.f32.mxu0 0.0
        %1600 = vmatmul.mubr.f32.gmra.mrb[0].mxu0 %v1425
        %v1601 = vpop.f32.mrb[0].mxu0
        %v1602 = vadd.f32 %v1464, %v1601
        %v1603 = vpop.f32.mrb[0].mxu0
        %1604 = vmatprep.mubr.f32.mxu0 0.0
        %1605 = vmatmul.mubr.f32.gmra.mrb[0].mxu0 %v1426
        %v1606 = vpop.f32.mrb[0].mxu0
        %v1607 = vadd.f32 %v1464, %v1606
        %v1608 = vpop.f32.mrb[0].mxu0
        %1609 = vmatprep.mubr.f32.mxu0 0.0
        %1610 = vmatmul.mubr.f32.gmra.mrb[0].mxu0 %v1427
        %v1611 = vpop.f32.mrb[0].mxu0
        %v1612 = vadd.f32 %v1464, %v1611
        %v1613 = vpop.f32.mrb[0].mxu0
        %1614 = vmatprep.mubr.f32.mxu0 0.0
        %1615 = vmatmul.mubr.f32.gmra.mrb[0].mxu0 %v1428
        %v1616 = vpop.f32.mrb[0].mxu0
        %v1617 = vadd.f32 %v1464, %v1616
        %v1618 = vpop.f32.mrb[0].mxu0
        %1619 = vmatprep.mubr.f32.mxu0 0.0
        %1620 = vmatmul.mubr.f32.gmra.mrb[0].mxu0 %v1429
        %v1621 = vpop.f32.mrb[0].mxu0
        %v1622 = vadd.f32 %v1464, %v1621
        %v1623 = vpop.f32.mrb[0].mxu0
        %1624 = vmatprep.mubr.f32.mxu0 0.0
        %1625 = vmatmul.mubr.f32.gmra.mrb[0].mxu0 %v1430
        %v1626 = vpop.f32.mrb[0].mxu0
        %v1627 = vadd.f32 %v1464, %v1626
        %v1628 = vpop.f32.mrb[0].mxu0
        %1629 = vmatprep.mubr.f32.mxu0 0.0
        %1630 = vmatmul.mubr.f32.gmra.mrb[0].mxu0 %v1431
        %v1631 = vpop.f32.mrb[0].mxu0
        %v1632 = vadd.f32 %v1464, %v1631
        %v1633 = vpop.f32.mrb[0].mxu0
        %1634 = vmatprep.mubr.f32.mxu0 0.0
        %1635 = vmatmul.mubr.f32.gmra.mrb[0].mxu0 %v1432
        %v1636 = vpop.f32.mrb[0].mxu0
        %v1637 = vadd.f32 %v1464, %v1636
        %v1638 = vpop.f32.mrb[0].mxu0
        %1639 = vmatprep.mubr.f32.mxu0 0.0
        %1640 = vmatmul.mubr.f32.gmra.mrb[0].mxu0 %v1433
        %v1641 = vpop.f32.mrb[0].mxu0
        %v1642 = vadd.f32 %v1464, %v1641
        %v1643 = vpop.f32.mrb[0].mxu0
        %1644 = vmatprep.mubr.f32.mxu0 0.0
        %1645 = vmatmul.mubr.f32.gmra.mrb[0].mxu0 %v1434
        %v1646 = vpop.f32.mrb[0].mxu0
        %v1647 = vadd.f32 %v1464, %v1646
        %v1648 = vpop.f32.mrb[0].mxu0
        %1649 = vmatprep.mubr.f32.mxu0 0.0
        %1650 = vmatmul.mubr.f32.gmra.mrb[0].mxu0 %v1435
        %v1651 = vpop.f32.mrb[0].mxu0
        %v1652 = vadd.f32 %v1464, %v1651
        %v1653 = vpop.f32.mrb[0].mxu0
        %1654 = vmatprep.mubr.f32.mxu0 0.0
        %1655 = vmatmul.mubr.f32.gmra.mrb[0].mxu0 %v1436
        %v1656 = vpop.f32.mrb[0].mxu0
        %v1657 = vadd.f32 %v1464, %v1656
        %v1658 = vpop.f32.mrb[0].mxu0
        %1659 = vmatprep.mubr.f32.mxu0 0.0
        %1660 = vmatmul.mubr.f32.gmra.mrb[0].mxu0 %v1437
        %v1661 = vpop.f32.mrb[0].mxu0
        %v1662 = vadd.f32 %v1464, %v1661
        %v1663 = vpop.f32.mrb[0].mxu0
        %1664 = vmatprep.mubr.f32.mxu0 0.0
        %1665 = vmatmul.mubr.f32.gmra.mrb[0].mxu0 %v1438
        %v1666 = vpop.f32.mrb[0].mxu0
        %v1667 = vadd.f32 %v1464, %v1666
        %v1668 = vpop.f32.mrb[0].mxu0
        %1669 = vmatprep.mubr.f32.mxu0 0.0
        %1670 = vmatmul.mubr.f32.gmra.mrb[0].mxu0 %v1439
        %v1671 = vpop.f32.mrb[0].mxu0
        %v1672 = vadd.f32 %v1464, %v1671
        %v1673 = vpop.f32.mrb[0].mxu0
        %1674 = vmatprep.mubr.f32.mxu0 0.0
        %1675 = vmatmul.mubr.f32.gmra.mrb[0].mxu0 %v1440
        %v1676 = vpop.f32.mrb[0].mxu0
        %v1677 = vadd.f32 %v1464, %v1676
        %v1678 = vpop.f32.mrb[0].mxu0
        %1679 = vmatprep.mubr.f32.mxu0 0.0
        %1680 = vmatmul.mubr.f32.gmra.mrb[0].mxu0 %v1441
        %v1681 = vpop.f32.mrb[0].mxu0
        %v1682 = vadd.f32 %v1464, %v1681
        %v1683 = vpop.f32.mrb[0].mxu0
        %1684 = vmatprep.mubr.f32.mxu0 0.0
        %1685 = vmatmul.mubr.f32.gmra.mrb[0].mxu0 %v1442
        %v1686 = vpop.f32.mrb[0].mxu0
        %v1687 = vadd.f32 %v1464, %v1686
        %v1688 = vpop.f32.mrb[0].mxu0
        %1689 = vdwg.mxu0
        %v1690 = vmax.f32 %v1532, 0.0
        %v1691 = vmax.f32 %v1537, 0.0
        %v1692 = vmax.f32 %v1542, 0.0
        %v1693 = vmax.f32 %v1547, 0.0
        %v1694 = vmax.f32 %v1552, 0.0
        %v1695 = vmax.f32 %v1557, 0.0
        %v1696 = vmax.f32 %v1562, 0.0
        %v1697 = vmax.f32 %v1567, 0.0
        %v1698 = vmax.f32 %v1572, 0.0
        %v1699 = vmax.f32 %v1577, 0.0
        %v1700 = vmax.f32 %v1582, 0.0
        %v1701 = vmax.f32 %v1587, 0.0
        %v1702 = vmax.f32 %v1592, 0.0
        %v1703 = vmax.f32 %v1597, 0.0
        %v1704 = vmax.f32 %v1602, 0.0
        %v1705 = vmax.f32 %v1607, 0.0
        %v1706 = vmax.f32 %v1612, 0.0
        %v1707 = vmax.f32 %v1617, 0.0
        %v1708 = vmax.f32 %v1622, 0.0
        %v1709 = vmax.f32 %v1627, 0.0
        %v1710 = vmax.f32 %v1632, 0.0
        %v1711 = vmax.f32 %v1637, 0.0
        %v1712 = vmax.f32 %v1642, 0.0
        %v1713 = vmax.f32 %v1647, 0.0
        %v1714 = vmax.f32 %v1652, 0.0
        %v1715 = vmax.f32 %v1657, 0.0
        %v1716 = vmax.f32 %v1662, 0.0
        %v1717 = vmax.f32 %v1667, 0.0
        %v1718 = vmax.f32 %v1672, 0.0
        %v1719 = vmax.f32 %v1677, 0.0
        %v1720 = vmax.f32 %v1682, 0.0
        %v1721 = vmax.f32 %v1687, 0.0
        %s1722 = scalar_lea.vmem [#allocation2], 512
        %v1723 = vld [vmem:[%s1722] sm:$0xff]
        %v1724 = vld [vmem:[%s1722 + $0x8] sm:$0xff]
        %v1725 = vld [vmem:[%s1722 + $0x10] sm:$0xff]
        %v1726 = vld [vmem:[%s1722 + $0x18] sm:$0xff]
        %v1727 = vld [vmem:[%s1722 + $0x20] sm:$0xff]
        %v1728 = vld [vmem:[%s1722 + $0x28] sm:$0xff]
        %v1729 = vld [vmem:[%s1722 + $0x30] sm:$0xff]
        %v1730 = vld [vmem:[%s1722 + $0x38] sm:$0xff]
        %v1731 = vld [vmem:[%s1722 + $0x40] sm:$0xff]
        %v1732 = vld [vmem:[%s1722 + $0x48] sm:$0xff]
        %v1733 = vld [vmem:[%s1722 + $0x50] sm:$0xff]
        %v1734 = vld [vmem:[%s1722 + $0x58] sm:$0xff]
        %v1735 = vld [vmem:[%s1722 + $0x60] sm:$0xff]
        %v1736 = vld [vmem:[%s1722 + $0x68] sm:$0xff]
        %v1737 = vld [vmem:[%s1722 + $0x70] sm:$0xff]
        %v1738 = vld [vmem:[%s1722 + $0x78] sm:$0xff]
        %v1739 = vld [vmem:[%s3 + $0x5] sm:$0x1]
        %v1740 = vlaneseq
        %v1741 = vshrl.u32 %v1740, 7
        %v1742 = vsub.s32 0, %v1741
        %v1743 = vrot.slane %v1739, %v1742
        %1744 = vmatprep.subr.mxu0 0.0
        %1745 = vmatpush1.msra.mxu0 %v1723
        %1746 = vmatprep.subr.mxu0 0.0
        %1747 = vmatpush1.msra.mxu0 %v1724
        %1748 = vmatprep.subr.mxu0 0.0
        %1749 = vmatpush1.msra.mxu0 %v1725
        %1750 = vmatprep.subr.mxu0 0.0
        %1751 = vmatpush1.msra.mxu0 %v1726
        %1752 = vmatprep.subr.mxu0 0.0
        %1753 = vmatpush1.msra.mxu0 %v1727
        %1754 = vmatprep.subr.mxu0 0.0
        %1755 = vmatpush1.msra.mxu0 %v1728
        %1756 = vmatprep.subr.mxu0 0.0
        %1757 = vmatpush1.msra.mxu0 %v1729
        %1758 = vmatprep.subr.mxu0 0.0
        %1759 = vmatpush1.msra.mxu0 %v1730
        %1760 = vmatprep.subr.mxu0 0.0
        %1761 = vmatpush1.msra.mxu0 %v1731
        %1762 = vmatprep.subr.mxu0 0.0
        %1763 = vmatpush1.msra.mxu0 %v1732
        %1764 = vmatprep.subr.mxu0 0.0
        %1765 = vmatpush1.msra.mxu0 %v1733
        %1766 = vmatprep.subr.mxu0 0.0
        %1767 = vmatpush1.msra.mxu0 %v1734
        %1768 = vmatprep.subr.mxu0 0.0
        %1769 = vmatpush1.msra.mxu0 %v1735
        %1770 = vmatprep.subr.mxu0 0.0
        %1771 = vmatpush1.msra.mxu0 %v1736
        %1772 = vmatprep.subr.mxu0 0.0
        %1773 = vmatpush1.msra.mxu0 %v1737
        %1774 = vmatprep.subr.mxu0 0.0
        %1775 = vmatpush1.msra.mxu0 %v1738
        %1776 = vmatprep.subr.mxu0 0.0
        %1777 = vmatpush1.msra.mxu0 0.0
        %1778 = vmatprep.subr.mxu0 0.0
        %1779 = vmatpush1.msra.mxu0 0.0
        %1780 = vmatprep.subr.mxu0 0.0
        %1781 = vmatpush1.msra.mxu0 0.0
        %1782 = vmatprep.subr.mxu0 0.0
        %1783 = vmatpush1.msra.mxu0 0.0
        %1784 = vmatprep.subr.mxu0 0.0
        %1785 = vmatpush1.msra.mxu0 0.0
        %1786 = vmatprep.subr.mxu0 0.0
        %1787 = vmatpush1.msra.mxu0 0.0
        %1788 = vmatprep.subr.mxu0 0.0
        %1789 = vmatpush1.msra.mxu0 0.0
        %1790 = vmatprep.subr.mxu0 0.0
        %1791 = vmatpush1.msra.mxu0 0.0
        %1792 = vmatprep.subr.mxu0 0.0
        %1793 = vmatpush1.msra.mxu0 0.0
        %1794 = vmatprep.subr.mxu0 0.0
        %1795 = vmatpush1.msra.mxu0 0.0
        %1796 = vmatprep.subr.mxu0 0.0
        %1797 = vmatpush1.msra.mxu0 0.0
        %1798 = vmatprep.subr.mxu0 0.0
        %1799 = vmatpush1.msra.mxu0 0.0
        %1800 = vmatprep.subr.mxu0 0.0
        %1801 = vmatpush1.msra.mxu0 0.0
        %1802 = vmatprep.subr.mxu0 0.0
        %1803 = vmatpush1.msra.mxu0 0.0
        %1804 = vmatprep.subr.mxu0 0.0
        %1805 = vmatpush1.msra.mxu0 0.0
        %1806 = vmatprep.subr.mxu0 0.0
        %1807 = vmatpush1.msra.mxu0 0.0
        %1808 = vmatprep.mubr.f32.mxu0 0.0
        %1809 = vmatmul.mubr.f32.gmra.mrb[0].mxu0 %v1690
        %v1810 = vpop.f32.mrb[0].mxu0
        %v1811 = vadd.f32 %v1743, %v1810
        %v1812 = vpop.f32.mrb[0].mxu0
        %1813 = vmatprep.mubr.f32.mxu0 0.0
        %1814 = vmatmul.mubr.f32.gmra.mrb[0].mxu0 %v1691
        %v1815 = vpop.f32.mrb[0].mxu0
        %v1816 = vadd.f32 %v1743, %v1815
        %v1817 = vpop.f32.mrb[0].mxu0
        %1818 = vmatprep.mubr.f32.mxu0 0.0
        %1819 = vmatmul.mubr.f32.gmra.mrb[0].mxu0 %v1692
        %v1820 = vpop.f32.mrb[0].mxu0
        %v1821 = vadd.f32 %v1743, %v1820
        %v1822 = vpop.f32.mrb[0].mxu0
        %1823 = vmatprep.mubr.f32.mxu0 0.0
        %1824 = vmatmul.mubr.f32.gmra.mrb[0].mxu0 %v1693
        %v1825 = vpop.f32.mrb[0].mxu0
        %v1826 = vadd.f32 %v1743, %v1825
        %v1827 = vpop.f32.mrb[0].mxu0
        %1828 = vmatprep.mubr.f32.mxu0 0.0
        %1829 = vmatmul.mubr.f32.gmra.mrb[0].mxu0 %v1694
        %v1830 = vpop.f32.mrb[0].mxu0
        %v1831 = vadd.f32 %v1743, %v1830
        %v1832 = vpop.f32.mrb[0].mxu0
        %1833 = vmatprep.mubr.f32.mxu0 0.0
        %1834 = vmatmul.mubr.f32.gmra.mrb[0].mxu0 %v1695
        %v1835 = vpop.f32.mrb[0].mxu0
        %v1836 = vadd.f32 %v1743, %v1835
        %v1837 = vpop.f32.mrb[0].mxu0
        %1838 = vmatprep.mubr.f32.mxu0 0.0
        %1839 = vmatmul.mubr.f32.gmra.mrb[0].mxu0 %v1696
        %v1840 = vpop.f32.mrb[0].mxu0
        %v1841 = vadd.f32 %v1743, %v1840
        %v1842 = vpop.f32.mrb[0].mxu0
        %1843 = vmatprep.mubr.f32.mxu0 0.0
        %1844 = vmatmul.mubr.f32.gmra.mrb[0].mxu0 %v1697
        %v1845 = vpop.f32.mrb[0].mxu0
        %v1846 = vadd.f32 %v1743, %v1845
        %v1847 = vpop.f32.mrb[0].mxu0
        %1848 = vmatprep.mubr.f32.mxu0 0.0
        %1849 = vmatmul.mubr.f32.gmra.mrb[0].mxu0 %v1698
        %v1850 = vpop.f32.mrb[0].mxu0
        %v1851 = vadd.f32 %v1743, %v1850
        %v1852 = vpop.f32.mrb[0].mxu0
        %1853 = vmatprep.mubr.f32.mxu0 0.0
        %1854 = vmatmul.mubr.f32.gmra.mrb[0].mxu0 %v1699
        %v1855 = vpop.f32.mrb[0].mxu0
        %v1856 = vadd.f32 %v1743, %v1855
        %v1857 = vpop.f32.mrb[0].mxu0
        %1858 = vmatprep.mubr.f32.mxu0 0.0
        %1859 = vmatmul.mubr.f32.gmra.mrb[0].mxu0 %v1700
        %v1860 = vpop.f32.mrb[0].mxu0
        %v1861 = vadd.f32 %v1743, %v1860
        %v1862 = vpop.f32.mrb[0].mxu0
        %1863 = vmatprep.mubr.f32.mxu0 0.0
        %1864 = vmatmul.mubr.f32.gmra.mrb[0].mxu0 %v1701
        %v1865 = vpop.f32.mrb[0].mxu0
        %v1866 = vadd.f32 %v1743, %v1865
        %v1867 = vpop.f32.mrb[0].mxu0
        %1868 = vmatprep.mubr.f32.mxu0 0.0
        %1869 = vmatmul.mubr.f32.gmra.mrb[0].mxu0 %v1702
        %v1870 = vpop.f32.mrb[0].mxu0
        %v1871 = vadd.f32 %v1743, %v1870
        %v1872 = vpop.f32.mrb[0].mxu0
        %1873 = vmatprep.mubr.f32.mxu0 0.0
        %1874 = vmatmul.mubr.f32.gmra.mrb[0].mxu0 %v1703
        %v1875 = vpop.f32.mrb[0].mxu0
        %v1876 = vadd.f32 %v1743, %v1875
        %v1877 = vpop.f32.mrb[0].mxu0
        %1878 = vmatprep.mubr.f32.mxu0 0.0
        %1879 = vmatmul.mubr.f32.gmra.mrb[0].mxu0 %v1704
        %v1880 = vpop.f32.mrb[0].mxu0
        %v1881 = vadd.f32 %v1743, %v1880
        %v1882 = vpop.f32.mrb[0].mxu0
        %1883 = vmatprep.mubr.f32.mxu0 0.0
        %1884 = vmatmul.mubr.f32.gmra.mrb[0].mxu0 %v1705
        %v1885 = vpop.f32.mrb[0].mxu0
        %v1886 = vadd.f32 %v1743, %v1885
        %v1887 = vpop.f32.mrb[0].mxu0
        %1888 = vmatprep.mubr.f32.mxu0 0.0
        %1889 = vmatmul.mubr.f32.gmra.mrb[0].mxu0 %v1706
        %v1890 = vpop.f32.mrb[0].mxu0
        %v1891 = vadd.f32 %v1743, %v1890
        %v1892 = vpop.f32.mrb[0].mxu0
        %1893 = vmatprep.mubr.f32.mxu0 0.0
        %1894 = vmatmul.mubr.f32.gmra.mrb[0].mxu0 %v1707
        %v1895 = vpop.f32.mrb[0].mxu0
        %v1896 = vadd.f32 %v1743, %v1895
        %v1897 = vpop.f32.mrb[0].mxu0
        %1898 = vmatprep.mubr.f32.mxu0 0.0
        %1899 = vmatmul.mubr.f32.gmra.mrb[0].mxu0 %v1708
        %v1900 = vpop.f32.mrb[0].mxu0
        %v1901 = vadd.f32 %v1743, %v1900
        %v1902 = vpop.f32.mrb[0].mxu0
        %1903 = vmatprep.mubr.f32.mxu0 0.0
        %1904 = vmatmul.mubr.f32.gmra.mrb[0].mxu0 %v1709
        %v1905 = vpop.f32.mrb[0].mxu0
        %v1906 = vadd.f32 %v1743, %v1905
        %v1907 = vpop.f32.mrb[0].mxu0
        %1908 = vmatprep.mubr.f32.mxu0 0.0
        %1909 = vmatmul.mubr.f32.gmra.mrb[0].mxu0 %v1710
        %v1910 = vpop.f32.mrb[0].mxu0
        %v1911 = vadd.f32 %v1743, %v1910
        %v1912 = vpop.f32.mrb[0].mxu0
        %1913 = vmatprep.mubr.f32.mxu0 0.0
        %1914 = vmatmul.mubr.f32.gmra.mrb[0].mxu0 %v1711
        %v1915 = vpop.f32.mrb[0].mxu0
        %v1916 = vadd.f32 %v1743, %v1915
        %v1917 = vpop.f32.mrb[0].mxu0
        %1918 = vmatprep.mubr.f32.mxu0 0.0
        %1919 = vmatmul.mubr.f32.gmra.mrb[0].mxu0 %v1712
        %v1920 = vpop.f32.mrb[0].mxu0
        %v1921 = vadd.f32 %v1743, %v1920
        %v1922 = vpop.f32.mrb[0].mxu0
        %1923 = vmatprep.mubr.f32.mxu0 0.0
        %1924 = vmatmul.mubr.f32.gmra.mrb[0].mxu0 %v1713
        %v1925 = vpop.f32.mrb[0].mxu0
        %v1926 = vadd.f32 %v1743, %v1925
        %v1927 = vpop.f32.mrb[0].mxu0
        %1928 = vmatprep.mubr.f32.mxu0 0.0
        %1929 = vmatmul.mubr.f32.gmra.mrb[0].mxu0 %v1714
        %v1930 = vpop.f32.mrb[0].mxu0
        %v1931 = vadd.f32 %v1743, %v1930
        %v1932 = vpop.f32.mrb[0].mxu0
        %1933 = vmatprep.mubr.f32.mxu0 0.0
        %1934 = vmatmul.mubr.f32.gmra.mrb[0].mxu0 %v1715
        %v1935 = vpop.f32.mrb[0].mxu0
        %v1936 = vadd.f32 %v1743, %v1935
        %v1937 = vpop.f32.mrb[0].mxu0
        %1938 = vmatprep.mubr.f32.mxu0 0.0
        %1939 = vmatmul.mubr.f32.gmra.mrb[0].mxu0 %v1716
        %v1940 = vpop.f32.mrb[0].mxu0
        %v1941 = vadd.f32 %v1743, %v1940
        %v1942 = vpop.f32.mrb[0].mxu0
        %1943 = vmatprep.mubr.f32.mxu0 0.0
        %1944 = vmatmul.mubr.f32.gmra.mrb[0].mxu0 %v1717
        %v1945 = vpop.f32.mrb[0].mxu0
        %v1946 = vadd.f32 %v1743, %v1945
        %v1947 = vpop.f32.mrb[0].mxu0
        %1948 = vmatprep.mubr.f32.mxu0 0.0
        %1949 = vmatmul.mubr.f32.gmra.mrb[0].mxu0 %v1718
        %v1950 = vpop.f32.mrb[0].mxu0
        %v1951 = vadd.f32 %v1743, %v1950
        %v1952 = vpop.f32.mrb[0].mxu0
        %1953 = vmatprep.mubr.f32.mxu0 0.0
        %1954 = vmatmul.mubr.f32.gmra.mrb[0].mxu0 %v1719
        %v1955 = vpop.f32.mrb[0].mxu0
        %v1956 = vadd.f32 %v1743, %v1955
        %v1957 = vpop.f32.mrb[0].mxu0
        %1958 = vmatprep.mubr.f32.mxu0 0.0
        %1959 = vmatmul.mubr.f32.gmra.mrb[0].mxu0 %v1720
        %v1960 = vpop.f32.mrb[0].mxu0
        %v1961 = vadd.f32 %v1743, %v1960
        %v1962 = vpop.f32.mrb[0].mxu0
        %1963 = vmatprep.mubr.f32.mxu0 0.0
        %1964 = vmatmul.mubr.f32.gmra.mrb[0].mxu0 %v1721
        %v1965 = vpop.f32.mrb[0].mxu0
        %v1966 = vadd.f32 %v1743, %v1965
        %v1967 = vpop.f32.mrb[0].mxu0
        %1968 = vdwg.mxu0
        %1969 = vst [vmem:[%s206] sm:$0xff] %v1811
        %1970 = vst [vmem:[%s206 + $0x8] sm:$0xff] %v1816
        %1971 = vst [vmem:[%s206 + $0x10] sm:$0xff] %v1821
        %1972 = vst [vmem:[%s206 + $0x18] sm:$0xff] %v1826
        %1973 = vst [vmem:[%s206 + $0x20] sm:$0xff] %v1831
        %1974 = vst [vmem:[%s206 + $0x28] sm:$0xff] %v1836
        %1975 = vst [vmem:[%s206 + $0x30] sm:$0xff] %v1841
        %1976 = vst [vmem:[%s206 + $0x38] sm:$0xff] %v1846
        %1977 = vst [vmem:[%s206 + $0x40] sm:$0xff] %v1851
        %1978 = vst [vmem:[%s206 + $0x48] sm:$0xff] %v1856
        %1979 = vst [vmem:[%s206 + $0x50] sm:$0xff] %v1861
        %1980 = vst [vmem:[%s206 + $0x58] sm:$0xff] %v1866
        %1981 = vst [vmem:[%s206 + $0x60] sm:$0xff] %v1871
        %1982 = vst [vmem:[%s206 + $0x68] sm:$0xff] %v1876
        %1983 = vst [vmem:[%s206 + $0x70] sm:$0xff] %v1881
        %1984 = vst [vmem:[%s206 + $0x78] sm:$0xff] %v1886
        %1985 = vst [vmem:[%s206 + $0x80] sm:$0xff] %v1891
        %1986 = vst [vmem:[%s206 + $0x88] sm:$0xff] %v1896
        %1987 = vst [vmem:[%s206 + $0x90] sm:$0xff] %v1901
        %1988 = vst [vmem:[%s206 + $0x98] sm:$0xff] %v1906
        %1989 = vst [vmem:[%s206 + $0xa0] sm:$0xff] %v1911
        %1990 = vst [vmem:[%s206 + $0xa8] sm:$0xff] %v1916
        %1991 = vst [vmem:[%s206 + $0xb0] sm:$0xff] %v1921
        %1992 = vst [vmem:[%s206 + $0xb8] sm:$0xff] %v1926
        %1993 = vst [vmem:[%s206 + $0xc0] sm:$0xff] %v1931
        %1994 = vst [vmem:[%s206 + $0xc8] sm:$0xff] %v1936
        %1995 = vst [vmem:[%s206 + $0xd0] sm:$0xff] %v1941
        %1996 = vst [vmem:[%s206 + $0xd8] sm:$0xff] %v1946
        %1997 = vst [vmem:[%s206 + $0xe0] sm:$0xff] %v1951
        %1998 = vst [vmem:[%s206 + $0xe8] sm:$0xff] %v1956
        %1999 = vst [vmem:[%s206 + $0xf0] sm:$0xff] %v1961
        %2000 = vst [vmem:[%s206 + $0xf8] sm:$0xff] %v1966
        %s2001 = sand.u32 %s116, 1
        %s2002 = scalar_lea.sflag [#allocation4], %s2001
        %s2003 = sand.u32 %s116, 1
        %s2004 = smul.addr %s2003, 256
        %s2005 = scalar_lea.vmem [#allocation5], %s2004
        // Predicated region
        $region41: #{tpu_custom_call.1} parent=35 // pred_check
          %p2006 = pneg %p126
        $region42: #{tpu_custom_call.1} parent=35 // pred_check_branch
          %2008 = sbr.rel (%p2006) target = $region44
        $region43: #{tpu_custom_call.1} parent=35 // pred_region
          %s2009 = smul.u32 32, %s19
          %s2011 = ssub.s32 4096, 4096
          %2012 = vsyncadd %s2002, %s2011
          %s2013 = smul.addr %s2009, 128
          %s2014 = scalar_lea.hbm %s4, %s2013
          %s2015 = sshll.u32 %s2005, 4
          %s2016 = int_to_ptr.vmem [resolvable:$true] %s2015
          %2021 = dma.vmem_to_hbm [thread:$0]  %s2016, 4096, %s2014, %s2002, 128, 128, 8
        $region44: #{tpu_custom_call.1} parent=35 // pred_fallthru
          _
      $region36: #{tpu_custom_call.1} parent=5 // pred_fallthru
        _
      %p2022 = scmp.le.s32.totalorder 2, %s14
      // Predicated region
      $region45: #{tpu_custom_call.1} parent=5 // pred_check
        %p2023 = pneg %p2022
      $region46: #{tpu_custom_call.1} parent=5 // pred_check_branch
        %2025 = sbr.rel (%p2023) target = $region48
      $region47: #{tpu_custom_call.1} parent=5 // pred_region
        %s2026 = ssub.s32 %s14, 2
        // Predicated region
        $region49: #{tpu_custom_call.1} parent=47 // pred_check
          %p2027 = pneg %p132
        $region50: #{tpu_custom_call.1} parent=47 // pred_check_branch
          %2029 = sbr.rel (%p2027) target = $region52
        $region51: #{tpu_custom_call.1} parent=47 // pred_region
          %s2030 = sand.u32 %s117, 1
          %s2031 = scalar_lea.sflag [#allocation4], %s2030
          %s2032 = sand.u32 %s117, 1
          %s2033 = smul.addr %s2032, 256
          %s2034 = scalar_lea.vmem [#allocation5], %s2033
          %2035 = dma.done %s2031, 4096
        $region52: #{tpu_custom_call.1} parent=47 // pred_fallthru
          _
      $region48: #{tpu_custom_call.1} parent=5 // pred_fallthru
        _
    $region6: #{tpu_custom_call.1} parent=1 // loop_footer
      %s18 = sadd.s32 1, %s14
    $region7: #{tpu_custom_call.1} parent=1 // loop_footer_branch
      %13 = sbr.rel target = $region3
    $region8: #{tpu_custom_call.1} parent=1 // loop_exit
      _
    %2036 = vsyncpa [#allocation3], 1
    %s2037 = scalar_lea.sflag [#allocation3], 1
    %2038 = vsyncpa %s2037, 1
    %2039 = vsyncpa [#allocation4], 1
    %s2040 = scalar_lea.sflag [#allocation4], 1
    %2041 = vsyncpa %s2040, 1

</llo_original>
